<compile_context>
chip_gen: v7x
topology: tpu7x:2x2x1
jax: 0.10.0
libtpu: 0.0.40
codegen_flags: <defaults>
</compile_context>

<pallas_src>
import functools

import jax
import jax.numpy as jnp
from jax.experimental import pallas as pl
from jax.experimental.pallas import tpu as pltpu

IN_FEATURES = 30 * 30 * 3          # 2700
HIDDEN = 128
OUT_FEATURES = 5

K_PAD = 2816                        # next multiple of 128 >= 2700
OUT_PAD = 128                       # lane-dense fc2 output / store


def _round_up(x, m):
    return ((x + m - 1) // m) * m


def mlp_kernel(x_ref, w1_ref, b1_ref, w2_ref, b2_ref, o_ref):
    # fc1: (TB, K_PAD) bf16 @ (K_PAD, 128) bf16 -> f32 accum
    h = jnp.dot(x_ref[...], w1_ref[...], preferred_element_type=jnp.float32)
    h = jnp.maximum(h + b1_ref[...], 0.0)
    # fc2: (TB, 128) bf16 @ (128, 128-padded) bf16 -> f32 accum
    y = jnp.dot(h.astype(jnp.bfloat16), w2_ref[...],
                preferred_element_type=jnp.float32)
    o_ref[...] = (y + b2_ref[...]).astype(o_ref.dtype)


@jax.jit
def nn_forward(x, w1, b1, w2, b2):
    """x: (B, 3, 30, 30) f32; w1: (2700, 128); b1: (1, 128);
    w2: (128, 5); b2: (1, 5)  ->  (B, 5) f32."""
    batch = x.shape[0]
    x_flat = x.reshape(batch, -1)               # == torch .view(batch, -1)

    # Batch tiling: TB rows per grid step, batch padded to a multiple of TB.
    tb = min(512, _round_up(batch, 8))
    b_pad = _round_up(batch, tb)
    grid = (b_pad // tb,)

    # Zero-pad + cast to bf16 for the MXU (accumulation stays f32 in-kernel).
    x_p = jnp.pad(x_flat, ((0, b_pad - batch), (0, K_PAD - IN_FEATURES)))
    x_p = x_p.astype(jnp.bfloat16)
    w1_p = jnp.pad(w1, ((0, K_PAD - IN_FEATURES), (0, 0))).astype(jnp.bfloat16)
    w2_p = jnp.pad(w2, ((0, 0), (0, OUT_PAD - OUT_FEATURES))).astype(jnp.bfloat16)
    b2_p = jnp.pad(b2, ((0, 0), (0, OUT_PAD - OUT_FEATURES)))

    flops = 2 * b_pad * K_PAD * HIDDEN + 2 * b_pad * HIDDEN * OUT_PAD
    bytes_accessed = (b_pad * K_PAD * 2                 # x (bf16)
                      + K_PAD * HIDDEN * 2              # w1 (bf16)
                      + HIDDEN * OUT_PAD * 2            # w2 (bf16)
                      + (HIDDEN + OUT_PAD) * 4          # biases (f32)
                      + b_pad * OUT_PAD * 4)            # output (f32)

    out = pl.pallas_call(
        mlp_kernel,
        out_shape=jax.ShapeDtypeStruct((b_pad, OUT_PAD), jnp.float32),
        grid=grid,
        in_specs=[
            pl.BlockSpec((tb, K_PAD), lambda i: (i, 0)),        # x tile
            pl.BlockSpec((K_PAD, HIDDEN), lambda i: (0, 0)),    # w1 (replicated)
            pl.BlockSpec((1, HIDDEN), lambda i: (0, 0)),        # b1
            pl.BlockSpec((HIDDEN, OUT_PAD), lambda i: (0, 0)),  # w2 (padded)
            pl.BlockSpec((1, OUT_PAD), lambda i: (0, 0)),       # b2 (padded)
        ],
        out_specs=pl.BlockSpec((tb, OUT_PAD), lambda i: (i, 0)),
        compiler_params=pltpu.CompilerParams(
            dimension_semantics=("parallel",),
            vmem_limit_bytes=32 << 20,
        ),
        cost_estimate=pl.CostEstimate(
            flops=flops, transcendentals=0, bytes_accessed=bytes_accessed),
    )(x_p, w1_p, b1, w2_p, b2_p)

    return out[:batch, :OUT_FEATURES]


def init_params(key):
    """Mimics nn.Linear's U(-1/sqrt(fan_in), 1/sqrt(fan_in)) init.
    Weights stored transposed vs. torch ((in, out)) so the kernel computes
    y = x @ W + b."""
    k1, k2, k3, k4 = jax.random.split(key, 4)
    bound1 = 1.0 / jnp.sqrt(jnp.float32(IN_FEATURES))
    bound2 = 1.0 / jnp.sqrt(jnp.float32(HIDDEN))
    w1 = jax.random.uniform(k1, (IN_FEATURES, HIDDEN), jnp.float32, -bound1, bound1)
    b1 = jax.random.uniform(k2, (1, HIDDEN), jnp.float32, -bound1, bound1)
    w2 = jax.random.uniform(k3, (HIDDEN, OUT_FEATURES), jnp.float32, -bound2, bound2)
    b2 = jax.random.uniform(k4, (1, OUT_FEATURES), jnp.float32, -bound2, bound2)
    return w1, b1, w2, b2


if __name__ == "__main__":
    key = jax.random.PRNGKey(0)
    kx, kp = jax.random.split(key)

    batch = 2
    x = jax.random.normal(kx, (batch, 3, 30, 30), jnp.float32)
    w1, b1, w2, b2 = init_params(kp)

    out = nn_forward(x, w1, b1, w2, b2)
    jax.block_until_ready(out)
    assert out.shape == (batch, OUT_FEATURES)

    # Reference with the same bf16-inputs / f32-accumulation recipe.
    x_flat = x.reshape(batch, -1)
    h_ref = jnp.maximum(
        jnp.dot(x_flat.astype(jnp.bfloat16), w1.astype(jnp.bfloat16),
                preferred_element_type=jnp.float32) + b1, 0.0)
    ref = jnp.dot(h_ref.astype(jnp.bfloat16), w2.astype(jnp.bfloat16),
                  preferred_element_type=jnp.float32) + b2
    assert jnp.allclose(out, ref, atol=2e-2, rtol=2e-2), (
        f"max abs diff {jnp.max(jnp.abs(out - ref))}")

    # Sanity vs. full-f32 math (bf16 rounding -> loose tolerance).
    ref_f32 = jnp.maximum(x_flat @ w1 + b1, 0.0) @ w2 + b2
    assert jnp.allclose(out, ref_f32, atol=8e-2, rtol=8e-2)

    print("KERNEL_OK")
</pallas_src>

<mosaic_0001>
module attributes {stable_mosaic.version = 11 : i64} {
  func.func @mlp_kernel(%arg0: i32, %arg1: memref<8x2816xbf16, #tpu.memory_space<vmem>>, %arg2: memref<2816x128xbf16, #tpu.memory_space<vmem>>, %arg3: memref<1x128xf32, #tpu.memory_space<vmem>>, %arg4: memref<128x128xbf16, #tpu.memory_space<vmem>>, %arg5: memref<1x128xf32, #tpu.memory_space<vmem>>, %arg6: memref<8x128xf32, #tpu.memory_space<vmem>>) attributes {dimension_semantics = [#tpu.dimension_semantics<parallel>], iteration_bounds = array<i64: 1>, scalar_prefetch = 0 : i64, scratch_operands = 0 : i64, tpu.core_type = #tpu.core_type<tc>, window_params = [{transform_indices = @transform_0, window_bounds = array<i64: 8, 2816>}, {pipeline_mode = #tpu.pipeline_mode<synchronous>, transform_indices = @transform_1, window_bounds = array<i64: 2816, 128>}, {pipeline_mode = #tpu.pipeline_mode<synchronous>, transform_indices = @transform_2, window_bounds = array<i64: 1, 128>}, {pipeline_mode = #tpu.pipeline_mode<synchronous>, transform_indices = @transform_3, window_bounds = array<i64: 128, 128>}, {pipeline_mode = #tpu.pipeline_mode<synchronous>, transform_indices = @transform_4, window_bounds = array<i64: 1, 128>}, {transform_indices = @transform_5, window_bounds = array<i64: 8, 128>}]} {
    %c0 = arith.constant 0 : index
    %c0_0 = arith.constant 0 : index
    %0 = vector.load %arg1[%c0, %c0_0] : memref<8x2816xbf16, #tpu.memory_space<vmem>>, vector<8x2816xbf16>
    %c0_1 = arith.constant 0 : index
    %c0_2 = arith.constant 0 : index
    %1 = vector.load %arg2[%c0_1, %c0_2] : memref<2816x128xbf16, #tpu.memory_space<vmem>>, vector<2816x128xbf16>
    %cst = arith.constant dense<0.000000e+00> : vector<8x128xf32>
    %2 = tpu.matmul %0, %1, %cst {dimension_numbers = #tpu.dot_dimension_numbers<[1], [0], [0], [1], [0, 0, 1, 1], [], []>} : vector<8x2816xbf16>, vector<2816x128xbf16>, vector<8x128xf32> -> vector<8x128xf32>
    %c0_3 = arith.constant 0 : index
    %c0_4 = arith.constant 0 : index
    %3 = vector.load %arg3[%c0_3, %c0_4] : memref<1x128xf32, #tpu.memory_space<vmem>>, vector<1x128xf32>
    %4 = vector.broadcast %3 : vector<1x128xf32> to vector<8x128xf32>
    %5 = arith.addf %2, %4 : vector<8x128xf32>
    %cst_5 = arith.constant 0.000000e+00 : f32
    %6 = vector.broadcast %cst_5 : f32 to vector<8x128xf32>
    %7 = arith.maximumf %5, %6 : vector<8x128xf32>
    %8 = arith.truncf %7 : vector<8x128xf32> to vector<8x128xbf16>
    %c0_6 = arith.constant 0 : index
    %c0_7 = arith.constant 0 : index
    %9 = vector.load %arg4[%c0_6, %c0_7] : memref<128x128xbf16, #tpu.memory_space<vmem>>, vector<128x128xbf16>
    %cst_8 = arith.constant dense<0.000000e+00> : vector<8x128xf32>
    %10 = tpu.matmul %8, %9, %cst_8 {dimension_numbers = #tpu.dot_dimension_numbers<[1], [0], [0], [1], [0, 0, 1, 1], [], []>} : vector<8x128xbf16>, vector<128x128xbf16>, vector<8x128xf32> -> vector<8x128xf32>
    %c0_9 = arith.constant 0 : index
    %c0_10 = arith.constant 0 : index
    %11 = vector.load %arg5[%c0_9, %c0_10] : memref<1x128xf32, #tpu.memory_space<vmem>>, vector<1x128xf32>
    %12 = vector.broadcast %11 : vector<1x128xf32> to vector<8x128xf32>
    %13 = arith.addf %10, %12 : vector<8x128xf32>
    %c0_11 = arith.constant 0 : index
    %c0_12 = arith.constant 0 : index
    %14 = vector.load %arg6[%c0_11, %c0_12] : memref<8x128xf32, #tpu.memory_space<vmem>>, vector<8x128xf32>
    tpu.vector_store %arg6[%c0_11, %c0_12], %13 {strides = array<i32>} : memref<8x128xf32, #tpu.memory_space<vmem>>, vector<8x128xf32>,
    return
  }
  func.func @transform_0(%arg0: i32) -> (i32, i32) {
    %c0_i32 = arith.constant 0 : i32
    %c0_i32_0 = arith.constant 0 : i32
    return %arg0, %c0_i32 : i32, i32
  }
  func.func @transform_1(%arg0: i32) -> (i32, i32) {
    %c0_i32 = arith.constant 0 : i32
    %c0_i32_0 = arith.constant 0 : i32
    %c0_i32_1 = arith.constant 0 : i32
    return %c0_i32, %c0_i32_0 : i32, i32
  }
  func.func @transform_2(%arg0: i32) -> (i32, i32) {
    %c0_i32 = arith.constant 0 : i32
    %c0_i32_0 = arith.constant 0 : i32
    %c0_i32_1 = arith.constant 0 : i32
    return %c0_i32, %c0_i32_0 : i32, i32
  }
  func.func @transform_3(%arg0: i32) -> (i32, i32) {
    %c0_i32 = arith.constant 0 : i32
    %c0_i32_0 = arith.constant 0 : i32
    %c0_i32_1 = arith.constant 0 : i32
    return %c0_i32, %c0_i32_0 : i32, i32
  }
  func.func @transform_4(%arg0: i32) -> (i32, i32) {
    %c0_i32 = arith.constant 0 : i32
    %c0_i32_0 = arith.constant 0 : i32
    %c0_i32_1 = arith.constant 0 : i32
    return %c0_i32, %c0_i32_0 : i32, i32
  }
  func.func @transform_5(%arg0: i32) -> (i32, i32) {
    %c0_i32 = arith.constant 0 : i32
    %c0_i32_0 = arith.constant 0 : i32
    return %arg0, %c0_i32 : i32, i32
  }
}

</mosaic_0001>

<llo_original>
// kernel: nn_forward.1
$region0: #{nn_forward.1}
  #allocation0 [shape = 'u32[]', space=smem, size = 0x4, offset = 0x4, fixed_abs, tag = 'smem constant byte address 0x4 - core index']
  #allocation1 [shape = 'u32[144,128]{1,0:T(1,128)}', space=vmem, size = 0x12000, scoped, tag = 'internal scratch']
  %s0 = inlined_call_operand.vmem [shape: bf16[8,2816], index: 0, kind: input, shape index: {}]
  %s1 = inlined_call_operand.vmem [shape: bf16[2816,128], index: 1, kind: input, shape index: {}]
  %s2 = inlined_call_operand.vmem [shape: f32[1,128], index: 2, kind: input, shape index: {}]
  %s3 = inlined_call_operand.vmem [shape: bf16[128,128], index: 3, kind: input, shape index: {}]
  %s4 = inlined_call_operand.vmem [shape: f32[1,128], index: 4, kind: input, shape index: {}]
  %s5 = inlined_call_operand.vmem [shape: f32[8,128], index: 5, kind: output, shape index: {}]
  %s6 = sld [smem:[#allocation0]]
  $region30: #{nn_forward.1} parent=0
    _
  %s8 = ssub.s32 1, %s6
  %s9 = scalar_select 0, %s8, %s6
  // Predicated region
  $region2: #{nn_forward.1} parent=0 // pred_check
    _
  $region3: #{nn_forward.1} parent=0 // pred_check_branch
    %11 = sbr.rel (0) target = $region5
  $region4: #{nn_forward.1} parent=0 // pred_region
    _
  $region5: #{nn_forward.1} parent=0 // pred_fallthru
    _
  // Predicated region
  $region6: #{nn_forward.1} parent=0 // pred_check
    _
  $region7: #{nn_forward.1} parent=0 // pred_check_branch
    %13 = sbr.rel (0) target = $region9
  $region8: #{nn_forward.1} parent=0 // pred_region
    _
  $region9: #{nn_forward.1} parent=0 // pred_fallthru
    _
  // Predicated region
  $region10: #{nn_forward.1} parent=0 // pred_check
    _
  $region11: #{nn_forward.1} parent=0 // pred_check_branch
    %15 = sbr.rel (0) target = $region13
  $region12: #{nn_forward.1} parent=0 // pred_region
    _
  $region13: #{nn_forward.1} parent=0 // pred_fallthru
    _
  // Predicated region
  $region14: #{nn_forward.1} parent=0 // pred_check
    _
  $region15: #{nn_forward.1} parent=0 // pred_check_branch
    %17 = sbr.rel (0) target = $region17
  $region16: #{nn_forward.1} parent=0 // pred_region
    _
  $region17: #{nn_forward.1} parent=0 // pred_fallthru
    _
  // Predicated region
  $region18: #{nn_forward.1} parent=0 // pred_check
    _
  $region19: #{nn_forward.1} parent=0 // pred_check_branch
    %19 = sbr.rel (0) target = $region21
  $region20: #{nn_forward.1} parent=0 // pred_region
    _
  $region21: #{nn_forward.1} parent=0 // pred_fallthru
    _
  %v21 = vld [vmem:[%s0] sm:$0xff]
  %v22 = vld [vmem:[%s0 + $0x8] sm:$0xff]
  %v23 = vld [vmem:[%s0 + $0x10] sm:$0xff]
  %v24 = vld [vmem:[%s0 + $0x18] sm:$0xff]
  %v25 = vld [vmem:[%s0 + $0x20] sm:$0xff]
  %v26 = vld [vmem:[%s0 + $0x28] sm:$0xff]
  %v27 = vld [vmem:[%s0 + $0x30] sm:$0xff]
  %v28 = vld [vmem:[%s0 + $0x38] sm:$0xff]
  %v29 = vld [vmem:[%s0 + $0x40] sm:$0xff]
  %v30 = vld [vmem:[%s0 + $0x48] sm:$0xff]
  %v31 = vld [vmem:[%s0 + $0x50] sm:$0xff]
  %v32 = vld [vmem:[%s1] sm:$0xf]
  %v33 = vld [vmem:[%s1 + $0x4] sm:$0xf]
  %v34 = vld [vmem:[%s1 + $0x8] sm:$0xf]
  %v35 = vld [vmem:[%s1 + $0xc] sm:$0xf]
  %v36 = vld [vmem:[%s1 + $0x10] sm:$0xf]
  %v37 = vld [vmem:[%s1 + $0x14] sm:$0xf]
  %v38 = vld [vmem:[%s1 + $0x18] sm:$0xf]
  %v39 = vld [vmem:[%s1 + $0x1c] sm:$0xf]
  %v40 = vld [vmem:[%s1 + $0x20] sm:$0xf]
  %v41 = vld [vmem:[%s1 + $0x24] sm:$0xf]
  %v42 = vld [vmem:[%s1 + $0x28] sm:$0xf]
  %v43 = vld [vmem:[%s1 + $0x2c] sm:$0xf]
  %v44 = vld [vmem:[%s1 + $0x30] sm:$0xf]
  %v45 = vld [vmem:[%s1 + $0x34] sm:$0xf]
  %v46 = vld [vmem:[%s1 + $0x38] sm:$0xf]
  %v47 = vld [vmem:[%s1 + $0x3c] sm:$0xf]
  %v48 = vld [vmem:[%s1 + $0x40] sm:$0xf]
  %v49 = vld [vmem:[%s1 + $0x44] sm:$0xf]
  %v50 = vld [vmem:[%s1 + $0x48] sm:$0xf]
  %v51 = vld [vmem:[%s1 + $0x4c] sm:$0xf]
  %v52 = vld [vmem:[%s1 + $0x50] sm:$0xf]
  %v53 = vld [vmem:[%s1 + $0x54] sm:$0xf]
  %v54 = vld [vmem:[%s1 + $0x58] sm:$0xf]
  %v55 = vld [vmem:[%s1 + $0x5c] sm:$0xf]
  %v56 = vld [vmem:[%s1 + $0x60] sm:$0xf]
  %v57 = vld [vmem:[%s1 + $0x64] sm:$0xf]
  %v58 = vld [vmem:[%s1 + $0x68] sm:$0xf]
  %v59 = vld [vmem:[%s1 + $0x6c] sm:$0xf]
  %v60 = vld [vmem:[%s1 + $0x70] sm:$0xf]
  %v61 = vld [vmem:[%s1 + $0x74] sm:$0xf]
  %v62 = vld [vmem:[%s1 + $0x78] sm:$0xf]
  %v63 = vld [vmem:[%s1 + $0x7c] sm:$0xf]
  %v64 = vld [vmem:[%s1 + $0x80] sm:$0xf]
  %v65 = vld [vmem:[%s1 + $0x84] sm:$0xf]
  %v66 = vld [vmem:[%s1 + $0x88] sm:$0xf]
  %v67 = vld [vmem:[%s1 + $0x8c] sm:$0xf]
  %v68 = vld [vmem:[%s1 + $0x90] sm:$0xf]
  %v69 = vld [vmem:[%s1 + $0x94] sm:$0xf]
  %v70 = vld [vmem:[%s1 + $0x98] sm:$0xf]
  %v71 = vld [vmem:[%s1 + $0x9c] sm:$0xf]
  %v72 = vld [vmem:[%s1 + $0xa0] sm:$0xf]
  %v73 = vld [vmem:[%s1 + $0xa4] sm:$0xf]
  %v74 = vld [vmem:[%s1 + $0xa8] sm:$0xf]
  %v75 = vld [vmem:[%s1 + $0xac] sm:$0xf]
  %v76 = vld [vmem:[%s1 + $0xb0] sm:$0xf]
  %v77 = vld [vmem:[%s1 + $0xb4] sm:$0xf]
  %v78 = vld [vmem:[%s1 + $0xb8] sm:$0xf]
  %v79 = vld [vmem:[%s1 + $0xbc] sm:$0xf]
  %v80 = vld [vmem:[%s1 + $0xc0] sm:$0xf]
  %v81 = vld [vmem:[%s1 + $0xc4] sm:$0xf]
  %v82 = vld [vmem:[%s1 + $0xc8] sm:$0xf]
  %v83 = vld [vmem:[%s1 + $0xcc] sm:$0xf]
  %v84 = vld [vmem:[%s1 + $0xd0] sm:$0xf]
  %v85 = vld [vmem:[%s1 + $0xd4] sm:$0xf]
  %v86 = vld [vmem:[%s1 + $0xd8] sm:$0xf]
  %v87 = vld [vmem:[%s1 + $0xdc] sm:$0xf]
  %v88 = vld [vmem:[%s1 + $0xe0] sm:$0xf]
  %v89 = vld [vmem:[%s1 + $0xe4] sm:$0xf]
  %v90 = vld [vmem:[%s1 + $0xe8] sm:$0xf]
  %v91 = vld [vmem:[%s1 + $0xec] sm:$0xf]
  %v92 = vld [vmem:[%s1 + $0xf0] sm:$0xf]
  %v93 = vld [vmem:[%s1 + $0xf4] sm:$0xf]
  %v94 = vld [vmem:[%s1 + $0xf8] sm:$0xf]
  %v95 = vld [vmem:[%s1 + $0xfc] sm:$0xf]
  %v96 = vld [vmem:[%s1 + $0x100] sm:$0xf]
  %v97 = vld [vmem:[%s1 + $0x104] sm:$0xf]
  %v98 = vld [vmem:[%s1 + $0x108] sm:$0xf]
  %v99 = vld [vmem:[%s1 + $0x10c] sm:$0xf]
  %v100 = vld [vmem:[%s1 + $0x110] sm:$0xf]
  %v101 = vld [vmem:[%s1 + $0x114] sm:$0xf]
  %v102 = vld [vmem:[%s1 + $0x118] sm:$0xf]
  %v103 = vld [vmem:[%s1 + $0x11c] sm:$0xf]
  %v104 = vld [vmem:[%s1 + $0x120] sm:$0xf]
  %v105 = vld [vmem:[%s1 + $0x124] sm:$0xf]
  %v106 = vld [vmem:[%s1 + $0x128] sm:$0xf]
  %v107 = vld [vmem:[%s1 + $0x12c] sm:$0xf]
  %v108 = vld [vmem:[%s1 + $0x130] sm:$0xf]
  %v109 = vld [vmem:[%s1 + $0x134] sm:$0xf]
  %v110 = vld [vmem:[%s1 + $0x138] sm:$0xf]
  %v111 = vld [vmem:[%s1 + $0x13c] sm:$0xf]
  %v112 = vld [vmem:[%s1 + $0x140] sm:$0xf]
  %v113 = vld [vmem:[%s1 + $0x144] sm:$0xf]
  %v114 = vld [vmem:[%s1 + $0x148] sm:$0xf]
  %v115 = vld [vmem:[%s1 + $0x14c] sm:$0xf]
  %v116 = vld [vmem:[%s1 + $0x150] sm:$0xf]
  %v117 = vld [vmem:[%s1 + $0x154] sm:$0xf]
  %v118 = vld [vmem:[%s1 + $0x158] sm:$0xf]
  %v119 = vld [vmem:[%s1 + $0x15c] sm:$0xf]
  %v120 = vld [vmem:[%s1 + $0x160] sm:$0xf]
  %v121 = vld [vmem:[%s1 + $0x164] sm:$0xf]
  %v122 = vld [vmem:[%s1 + $0x168] sm:$0xf]
  %v123 = vld [vmem:[%s1 + $0x16c] sm:$0xf]
  %v124 = vld [vmem:[%s1 + $0x170] sm:$0xf]
  %v125 = vld [vmem:[%s1 + $0x174] sm:$0xf]
  %v126 = vld [vmem:[%s1 + $0x178] sm:$0xf]
  %v127 = vld [vmem:[%s1 + $0x17c] sm:$0xf]
  %v128 = vld [vmem:[%s1 + $0x180] sm:$0xf]
  %v129 = vld [vmem:[%s1 + $0x184] sm:$0xf]
  %v130 = vld [vmem:[%s1 + $0x188] sm:$0xf]
  %v131 = vld [vmem:[%s1 + $0x18c] sm:$0xf]
  %v132 = vld [vmem:[%s1 + $0x190] sm:$0xf]
  %v133 = vld [vmem:[%s1 + $0x194] sm:$0xf]
  %v134 = vld [vmem:[%s1 + $0x198] sm:$0xf]
  %v135 = vld [vmem:[%s1 + $0x19c] sm:$0xf]
  %v136 = vld [vmem:[%s1 + $0x1a0] sm:$0xf]
  %v137 = vld [vmem:[%s1 + $0x1a4] sm:$0xf]
  %v138 = vld [vmem:[%s1 + $0x1a8] sm:$0xf]
  %v139 = vld [vmem:[%s1 + $0x1ac] sm:$0xf]
  %v140 = vld [vmem:[%s1 + $0x1b0] sm:$0xf]
  %v141 = vld [vmem:[%s1 + $0x1b4] sm:$0xf]
  %v142 = vld [vmem:[%s1 + $0x1b8] sm:$0xf]
  %v143 = vld [vmem:[%s1 + $0x1bc] sm:$0xf]
  %v144 = vld [vmem:[%s1 + $0x1c0] sm:$0xf]
  %v145 = vld [vmem:[%s1 + $0x1c4] sm:$0xf]
  %v146 = vld [vmem:[%s1 + $0x1c8] sm:$0xf]
  %v147 = vld [vmem:[%s1 + $0x1cc] sm:$0xf]
  %v148 = vld [vmem:[%s1 + $0x1d0] sm:$0xf]
  %v149 = vld [vmem:[%s1 + $0x1d4] sm:$0xf]
  %v150 = vld [vmem:[%s1 + $0x1d8] sm:$0xf]
  %v151 = vld [vmem:[%s1 + $0x1dc] sm:$0xf]
  %v152 = vld [vmem:[%s1 + $0x1e0] sm:$0xf]
  %v153 = vld [vmem:[%s1 + $0x1e4] sm:$0xf]
  %v154 = vld [vmem:[%s1 + $0x1e8] sm:$0xf]
  %v155 = vld [vmem:[%s1 + $0x1ec] sm:$0xf]
  %v156 = vld [vmem:[%s1 + $0x1f0] sm:$0xf]
  %v157 = vld [vmem:[%s1 + $0x1f4] sm:$0xf]
  %v158 = vld [vmem:[%s1 + $0x1f8] sm:$0xf]
  %v159 = vld [vmem:[%s1 + $0x1fc] sm:$0xf]
  %v160 = vld [vmem:[%s1 + $0x200] sm:$0xf]
  %v161 = vld [vmem:[%s1 + $0x204] sm:$0xf]
  %v162 = vld [vmem:[%s1 + $0x208] sm:$0xf]
  %v163 = vld [vmem:[%s1 + $0x20c] sm:$0xf]
  %v164 = vld [vmem:[%s1 + $0x210] sm:$0xf]
  %v165 = vld [vmem:[%s1 + $0x214] sm:$0xf]
  %v166 = vld [vmem:[%s1 + $0x218] sm:$0xf]
  %v167 = vld [vmem:[%s1 + $0x21c] sm:$0xf]
  %v168 = vld [vmem:[%s1 + $0x220] sm:$0xf]
  %v169 = vld [vmem:[%s1 + $0x224] sm:$0xf]
  %v170 = vld [vmem:[%s1 + $0x228] sm:$0xf]
  %v171 = vld [vmem:[%s1 + $0x22c] sm:$0xf]
  %v172 = vld [vmem:[%s1 + $0x230] sm:$0xf]
  %v173 = vld [vmem:[%s1 + $0x234] sm:$0xf]
  %v174 = vld [vmem:[%s1 + $0x238] sm:$0xf]
  %v175 = vld [vmem:[%s1 + $0x23c] sm:$0xf]
  %v176 = vld [vmem:[%s1 + $0x240] sm:$0xf]
  %v177 = vld [vmem:[%s1 + $0x244] sm:$0xf]
  %v178 = vld [vmem:[%s1 + $0x248] sm:$0xf]
  %v179 = vld [vmem:[%s1 + $0x24c] sm:$0xf]
  %v180 = vld [vmem:[%s1 + $0x250] sm:$0xf]
  %v181 = vld [vmem:[%s1 + $0x254] sm:$0xf]
  %v182 = vld [vmem:[%s1 + $0x258] sm:$0xf]
  %v183 = vld [vmem:[%s1 + $0x25c] sm:$0xf]
  %v184 = vld [vmem:[%s1 + $0x260] sm:$0xf]
  %v185 = vld [vmem:[%s1 + $0x264] sm:$0xf]
  %v186 = vld [vmem:[%s1 + $0x268] sm:$0xf]
  %v187 = vld [vmem:[%s1 + $0x26c] sm:$0xf]
  %v188 = vld [vmem:[%s1 + $0x270] sm:$0xf]
  %v189 = vld [vmem:[%s1 + $0x274] sm:$0xf]
  %v190 = vld [vmem:[%s1 + $0x278] sm:$0xf]
  %v191 = vld [vmem:[%s1 + $0x27c] sm:$0xf]
  %v192 = vld [vmem:[%s1 + $0x280] sm:$0xf]
  %v193 = vld [vmem:[%s1 + $0x284] sm:$0xf]
  %v194 = vld [vmem:[%s1 + $0x288] sm:$0xf]
  %v195 = vld [vmem:[%s1 + $0x28c] sm:$0xf]
  %v196 = vld [vmem:[%s1 + $0x290] sm:$0xf]
  %v197 = vld [vmem:[%s1 + $0x294] sm:$0xf]
  %v198 = vld [vmem:[%s1 + $0x298] sm:$0xf]
  %v199 = vld [vmem:[%s1 + $0x29c] sm:$0xf]
  %v200 = vld [vmem:[%s1 + $0x2a0] sm:$0xf]
  %v201 = vld [vmem:[%s1 + $0x2a4] sm:$0xf]
  %v202 = vld [vmem:[%s1 + $0x2a8] sm:$0xf]
  %v203 = vld [vmem:[%s1 + $0x2ac] sm:$0xf]
  %v204 = vld [vmem:[%s1 + $0x2b0] sm:$0xf]
  %v205 = vld [vmem:[%s1 + $0x2b4] sm:$0xf]
  %v206 = vld [vmem:[%s1 + $0x2b8] sm:$0xf]
  %v207 = vld [vmem:[%s1 + $0x2bc] sm:$0xf]
  %v208 = vld [vmem:[%s1 + $0x2c0] sm:$0xf]
  %v209 = vld [vmem:[%s1 + $0x2c4] sm:$0xf]
  %v210 = vld [vmem:[%s1 + $0x2c8] sm:$0xf]
  %v211 = vld [vmem:[%s1 + $0x2cc] sm:$0xf]
  %v212 = vld [vmem:[%s1 + $0x2d0] sm:$0xf]
  %v213 = vld [vmem:[%s1 + $0x2d4] sm:$0xf]
  %v214 = vld [vmem:[%s1 + $0x2d8] sm:$0xf]
  %v215 = vld [vmem:[%s1 + $0x2dc] sm:$0xf]
  %v216 = vld [vmem:[%s1 + $0x2e0] sm:$0xf]
  %v217 = vld [vmem:[%s1 + $0x2e4] sm:$0xf]
  %v218 = vld [vmem:[%s1 + $0x2e8] sm:$0xf]
  %v219 = vld [vmem:[%s1 + $0x2ec] sm:$0xf]
  %v220 = vld [vmem:[%s1 + $0x2f0] sm:$0xf]
  %v221 = vld [vmem:[%s1 + $0x2f4] sm:$0xf]
  %v222 = vld [vmem:[%s1 + $0x2f8] sm:$0xf]
  %v223 = vld [vmem:[%s1 + $0x2fc] sm:$0xf]
  %v224 = vld [vmem:[%s1 + $0x300] sm:$0xf]
  %v225 = vld [vmem:[%s1 + $0x304] sm:$0xf]
  %v226 = vld [vmem:[%s1 + $0x308] sm:$0xf]
  %v227 = vld [vmem:[%s1 + $0x30c] sm:$0xf]
  %v228 = vld [vmem:[%s1 + $0x310] sm:$0xf]
  %v229 = vld [vmem:[%s1 + $0x314] sm:$0xf]
  %v230 = vld [vmem:[%s1 + $0x318] sm:$0xf]
  %v231 = vld [vmem:[%s1 + $0x31c] sm:$0xf]
  %v232 = vld [vmem:[%s1 + $0x320] sm:$0xf]
  %v233 = vld [vmem:[%s1 + $0x324] sm:$0xf]
  %v234 = vld [vmem:[%s1 + $0x328] sm:$0xf]
  %v235 = vld [vmem:[%s1 + $0x32c] sm:$0xf]
  %v236 = vld [vmem:[%s1 + $0x330] sm:$0xf]
  %v237 = vld [vmem:[%s1 + $0x334] sm:$0xf]
  %v238 = vld [vmem:[%s1 + $0x338] sm:$0xf]
  %v239 = vld [vmem:[%s1 + $0x33c] sm:$0xf]
  %v240 = vld [vmem:[%s1 + $0x340] sm:$0xf]
  %v241 = vld [vmem:[%s1 + $0x344] sm:$0xf]
  %v242 = vld [vmem:[%s1 + $0x348] sm:$0xf]
  %v243 = vld [vmem:[%s1 + $0x34c] sm:$0xf]
  %v244 = vld [vmem:[%s1 + $0x350] sm:$0xf]
  %v245 = vld [vmem:[%s1 + $0x354] sm:$0xf]
  %v246 = vld [vmem:[%s1 + $0x358] sm:$0xf]
  %v247 = vld [vmem:[%s1 + $0x35c] sm:$0xf]
  %v248 = vld [vmem:[%s1 + $0x360] sm:$0xf]
  %v249 = vld [vmem:[%s1 + $0x364] sm:$0xf]
  %v250 = vld [vmem:[%s1 + $0x368] sm:$0xf]
  %v251 = vld [vmem:[%s1 + $0x36c] sm:$0xf]
  %v252 = vld [vmem:[%s1 + $0x370] sm:$0xf]
  %v253 = vld [vmem:[%s1 + $0x374] sm:$0xf]
  %v254 = vld [vmem:[%s1 + $0x378] sm:$0xf]
  %v255 = vld [vmem:[%s1 + $0x37c] sm:$0xf]
  %v256 = vld [vmem:[%s1 + $0x380] sm:$0xf]
  %v257 = vld [vmem:[%s1 + $0x384] sm:$0xf]
  %v258 = vld [vmem:[%s1 + $0x388] sm:$0xf]
  %v259 = vld [vmem:[%s1 + $0x38c] sm:$0xf]
  %v260 = vld [vmem:[%s1 + $0x390] sm:$0xf]
  %v261 = vld [vmem:[%s1 + $0x394] sm:$0xf]
  %v262 = vld [vmem:[%s1 + $0x398] sm:$0xf]
  %v263 = vld [vmem:[%s1 + $0x39c] sm:$0xf]
  %v264 = vld [vmem:[%s1 + $0x3a0] sm:$0xf]
  %v265 = vld [vmem:[%s1 + $0x3a4] sm:$0xf]
  %v266 = vld [vmem:[%s1 + $0x3a8] sm:$0xf]
  %v267 = vld [vmem:[%s1 + $0x3ac] sm:$0xf]
  %v268 = vld [vmem:[%s1 + $0x3b0] sm:$0xf]
  %v269 = vld [vmem:[%s1 + $0x3b4] sm:$0xf]
  %v270 = vld [vmem:[%s1 + $0x3b8] sm:$0xf]
  %v271 = vld [vmem:[%s1 + $0x3bc] sm:$0xf]
  %v272 = vld [vmem:[%s1 + $0x3c0] sm:$0xf]
  %v273 = vld [vmem:[%s1 + $0x3c4] sm:$0xf]
  %v274 = vld [vmem:[%s1 + $0x3c8] sm:$0xf]
  %v275 = vld [vmem:[%s1 + $0x3cc] sm:$0xf]
  %v276 = vld [vmem:[%s1 + $0x3d0] sm:$0xf]
  %v277 = vld [vmem:[%s1 + $0x3d4] sm:$0xf]
  %v278 = vld [vmem:[%s1 + $0x3d8] sm:$0xf]
  %v279 = vld [vmem:[%s1 + $0x3dc] sm:$0xf]
  %v280 = vld [vmem:[%s1 + $0x3e0] sm:$0xf]
  %v281 = vld [vmem:[%s1 + $0x3e4] sm:$0xf]
  %v282 = vld [vmem:[%s1 + $0x3e8] sm:$0xf]
  %v283 = vld [vmem:[%s1 + $0x3ec] sm:$0xf]
  %v284 = vld [vmem:[%s1 + $0x3f0] sm:$0xf]
  %v285 = vld [vmem:[%s1 + $0x3f4] sm:$0xf]
  %v286 = vld [vmem:[%s1 + $0x3f8] sm:$0xf]
  %v287 = vld [vmem:[%s1 + $0x3fc] sm:$0xf]
  %v288 = vld [vmem:[%s1 + $0x400] sm:$0xf]
  %v289 = vld [vmem:[%s1 + $0x404] sm:$0xf]
  %v290 = vld [vmem:[%s1 + $0x408] sm:$0xf]
  %v291 = vld [vmem:[%s1 + $0x40c] sm:$0xf]
  %v292 = vld [vmem:[%s1 + $0x410] sm:$0xf]
  %v293 = vld [vmem:[%s1 + $0x414] sm:$0xf]
  %v294 = vld [vmem:[%s1 + $0x418] sm:$0xf]
  %v295 = vld [vmem:[%s1 + $0x41c] sm:$0xf]
  %v296 = vld [vmem:[%s1 + $0x420] sm:$0xf]
  %v297 = vld [vmem:[%s1 + $0x424] sm:$0xf]
  %v298 = vld [vmem:[%s1 + $0x428] sm:$0xf]
  %v299 = vld [vmem:[%s1 + $0x42c] sm:$0xf]
  %v300 = vld [vmem:[%s1 + $0x430] sm:$0xf]
  %v301 = vld [vmem:[%s1 + $0x434] sm:$0xf]
  %v302 = vld [vmem:[%s1 + $0x438] sm:$0xf]
  %v303 = vld [vmem:[%s1 + $0x43c] sm:$0xf]
  %v304 = vld [vmem:[%s1 + $0x440] sm:$0xf]
  %v305 = vld [vmem:[%s1 + $0x444] sm:$0xf]
  %v306 = vld [vmem:[%s1 + $0x448] sm:$0xf]
  %v307 = vld [vmem:[%s1 + $0x44c] sm:$0xf]
  %v308 = vld [vmem:[%s1 + $0x450] sm:$0xf]
  %v309 = vld [vmem:[%s1 + $0x454] sm:$0xf]
  %v310 = vld [vmem:[%s1 + $0x458] sm:$0xf]
  %v311 = vld [vmem:[%s1 + $0x45c] sm:$0xf]
  %v312 = vld [vmem:[%s1 + $0x460] sm:$0xf]
  %v313 = vld [vmem:[%s1 + $0x464] sm:$0xf]
  %v314 = vld [vmem:[%s1 + $0x468] sm:$0xf]
  %v315 = vld [vmem:[%s1 + $0x46c] sm:$0xf]
  %v316 = vld [vmem:[%s1 + $0x470] sm:$0xf]
  %v317 = vld [vmem:[%s1 + $0x474] sm:$0xf]
  %v318 = vld [vmem:[%s1 + $0x478] sm:$0xf]
  %v319 = vld [vmem:[%s1 + $0x47c] sm:$0xf]
  %v320 = vld [vmem:[%s1 + $0x480] sm:$0xf]
  %v321 = vld [vmem:[%s1 + $0x484] sm:$0xf]
  %v322 = vld [vmem:[%s1 + $0x488] sm:$0xf]
  %v323 = vld [vmem:[%s1 + $0x48c] sm:$0xf]
  %v324 = vld [vmem:[%s1 + $0x490] sm:$0xf]
  %v325 = vld [vmem:[%s1 + $0x494] sm:$0xf]
  %v326 = vld [vmem:[%s1 + $0x498] sm:$0xf]
  %v327 = vld [vmem:[%s1 + $0x49c] sm:$0xf]
  %v328 = vld [vmem:[%s1 + $0x4a0] sm:$0xf]
  %v329 = vld [vmem:[%s1 + $0x4a4] sm:$0xf]
  %v330 = vld [vmem:[%s1 + $0x4a8] sm:$0xf]
  %v331 = vld [vmem:[%s1 + $0x4ac] sm:$0xf]
  %v332 = vld [vmem:[%s1 + $0x4b0] sm:$0xf]
  %v333 = vld [vmem:[%s1 + $0x4b4] sm:$0xf]
  %v334 = vld [vmem:[%s1 + $0x4b8] sm:$0xf]
  %v335 = vld [vmem:[%s1 + $0x4bc] sm:$0xf]
  %v336 = vld [vmem:[%s1 + $0x4c0] sm:$0xf]
  %v337 = vld [vmem:[%s1 + $0x4c4] sm:$0xf]
  %v338 = vld [vmem:[%s1 + $0x4c8] sm:$0xf]
  %v339 = vld [vmem:[%s1 + $0x4cc] sm:$0xf]
  %v340 = vld [vmem:[%s1 + $0x4d0] sm:$0xf]
  %v341 = vld [vmem:[%s1 + $0x4d4] sm:$0xf]
  %v342 = vld [vmem:[%s1 + $0x4d8] sm:$0xf]
  %v343 = vld [vmem:[%s1 + $0x4dc] sm:$0xf]
  %v344 = vld [vmem:[%s1 + $0x4e0] sm:$0xf]
  %v345 = vld [vmem:[%s1 + $0x4e4] sm:$0xf]
  %v346 = vld [vmem:[%s1 + $0x4e8] sm:$0xf]
  %v347 = vld [vmem:[%s1 + $0x4ec] sm:$0xf]
  %v348 = vld [vmem:[%s1 + $0x4f0] sm:$0xf]
  %v349 = vld [vmem:[%s1 + $0x4f4] sm:$0xf]
  %v350 = vld [vmem:[%s1 + $0x4f8] sm:$0xf]
  %v351 = vld [vmem:[%s1 + $0x4fc] sm:$0xf]
  %v352 = vld [vmem:[%s1 + $0x500] sm:$0xf]
  %v353 = vld [vmem:[%s1 + $0x504] sm:$0xf]
  %v354 = vld [vmem:[%s1 + $0x508] sm:$0xf]
  %v355 = vld [vmem:[%s1 + $0x50c] sm:$0xf]
  %v356 = vld [vmem:[%s1 + $0x510] sm:$0xf]
  %v357 = vld [vmem:[%s1 + $0x514] sm:$0xf]
  %v358 = vld [vmem:[%s1 + $0x518] sm:$0xf]
  %v359 = vld [vmem:[%s1 + $0x51c] sm:$0xf]
  %v360 = vld [vmem:[%s1 + $0x520] sm:$0xf]
  %v361 = vld [vmem:[%s1 + $0x524] sm:$0xf]
  %v362 = vld [vmem:[%s1 + $0x528] sm:$0xf]
  %v363 = vld [vmem:[%s1 + $0x52c] sm:$0xf]
  %v364 = vld [vmem:[%s1 + $0x530] sm:$0xf]
  %v365 = vld [vmem:[%s1 + $0x534] sm:$0xf]
  %v366 = vld [vmem:[%s1 + $0x538] sm:$0xf]
  %v367 = vld [vmem:[%s1 + $0x53c] sm:$0xf]
  %v368 = vld [vmem:[%s1 + $0x540] sm:$0xf]
  %v369 = vld [vmem:[%s1 + $0x544] sm:$0xf]
  %v370 = vld [vmem:[%s1 + $0x548] sm:$0xf]
  %v371 = vld [vmem:[%s1 + $0x54c] sm:$0xf]
  %v372 = vld [vmem:[%s1 + $0x550] sm:$0xf]
  %v373 = vld [vmem:[%s1 + $0x554] sm:$0xf]
  %v374 = vld [vmem:[%s1 + $0x558] sm:$0xf]
  %v375 = vld [vmem:[%s1 + $0x55c] sm:$0xf]
  %v376 = vld [vmem:[%s1 + $0x560] sm:$0xf]
  %v377 = vld [vmem:[%s1 + $0x564] sm:$0xf]
  %v378 = vld [vmem:[%s1 + $0x568] sm:$0xf]
  %v379 = vld [vmem:[%s1 + $0x56c] sm:$0xf]
  %v380 = vld [vmem:[%s1 + $0x570] sm:$0xf]
  %v381 = vld [vmem:[%s1 + $0x574] sm:$0xf]
  %v382 = vld [vmem:[%s1 + $0x578] sm:$0xf]
  %v383 = vld [vmem:[%s1 + $0x57c] sm:$0xf]
  %v384 = vld [vmem:[%s2] sm:$0x1]
  %v386 = vlaneseq
  %v387 = vshrl.u32 %v386, 7
  %v388 = vsub.s32 0, %v387
  %v389 = vrot.slane %v384, %v388
  %v402 = vunpack.c.l.b16 %v21
  %v403 = vunpack.c.h.b16 %v21
  %v404 = vunpack.c.l.b16 %v22
  %v405 = vunpack.c.h.b16 %v22
  %v406 = vunpack.c.l.b16 %v23
  %v407 = vunpack.c.h.b16 %v23
  %v408 = vunpack.c.l.b16 %v24
  %v409 = vunpack.c.h.b16 %v24
  %v410 = vunpack.c.l.b16 %v25
  %v411 = vunpack.c.h.b16 %v25
  %v412 = vunpack.c.l.b16 %v26
  %v413 = vunpack.c.h.b16 %v26
  %v414 = vunpack.c.l.b16 %v27
  %v415 = vunpack.c.h.b16 %v27
  %v416 = vunpack.c.l.b16 %v28
  %v417 = vunpack.c.h.b16 %v28
  %v418 = vunpack.c.l.b16 %v29
  %v419 = vunpack.c.h.b16 %v29
  %v420 = vunpack.c.l.b16 %v30
  %v421 = vunpack.c.h.b16 %v30
  %v422 = vunpack.c.l.b16 %v31
  %v423 = vunpack.c.h.b16 %v31
  %v424 = vpack.c.b16 %v402, %v402
  %v425 = vpack.c.b16 %v403, %v403
  %v426 = vpack.c.b16 %v404, %v404
  %v427 = vpack.c.b16 %v405, %v405
  %v428 = vpack.c.b16 %v406, %v406
  %v429 = vpack.c.b16 %v407, %v407
  %v430 = vpack.c.b16 %v408, %v408
  %v431 = vpack.c.b16 %v409, %v409
  %v432 = vpack.c.b16 %v410, %v410
  %v433 = vpack.c.b16 %v411, %v411
  %v434 = vpack.c.b16 %v412, %v412
  %v435 = vpack.c.b16 %v413, %v413
  %v436 = vpack.c.b16 %v414, %v414
  %v437 = vpack.c.b16 %v415, %v415
  %v438 = vpack.c.b16 %v416, %v416
  %v439 = vpack.c.b16 %v417, %v417
  %v440 = vpack.c.b16 %v418, %v418
  %v441 = vpack.c.b16 %v419, %v419
  %v442 = vpack.c.b16 %v420, %v420
  %v443 = vpack.c.b16 %v421, %v421
  %v444 = vpack.c.b16 %v422, %v422
  %v445 = vpack.c.b16 %v423, %v423
  %v820 = vunpack.c.l.b16 %v32
  %v821 = vunpack.c.l.b16 %v33
  %v822 = vunpack.c.l.b16 %v34
  %v823 = vunpack.c.l.b16 %v35
  %v824 = vunpack.c.l.b16 %v36
  %v825 = vunpack.c.l.b16 %v37
  %v826 = vunpack.c.l.b16 %v38
  %v827 = vunpack.c.l.b16 %v39
  %v828 = vunpack.c.l.b16 %v40
  %v829 = vunpack.c.l.b16 %v41
  %v830 = vunpack.c.l.b16 %v42
  %v831 = vunpack.c.l.b16 %v43
  %v832 = vunpack.c.l.b16 %v44
  %v833 = vunpack.c.l.b16 %v45
  %v834 = vunpack.c.l.b16 %v46
  %v835 = vunpack.c.l.b16 %v47
  %v836 = vunpack.c.l.b16 %v48
  %v837 = vunpack.c.l.b16 %v49
  %v838 = vunpack.c.l.b16 %v50
  %v839 = vunpack.c.l.b16 %v51
  %v840 = vunpack.c.l.b16 %v52
  %v841 = vunpack.c.l.b16 %v53
  %v842 = vunpack.c.l.b16 %v54
  %v843 = vunpack.c.l.b16 %v55
  %v844 = vunpack.c.l.b16 %v56
  %v845 = vunpack.c.l.b16 %v57
  %v846 = vunpack.c.l.b16 %v58
  %v847 = vunpack.c.l.b16 %v59
  %v848 = vunpack.c.l.b16 %v60
  %v849 = vunpack.c.l.b16 %v61
  %v850 = vunpack.c.l.b16 %v62
  %v851 = vunpack.c.l.b16 %v63
  %v852 = vunpack.c.l.b16 %v64
  %v853 = vunpack.c.l.b16 %v65
  %v854 = vunpack.c.l.b16 %v66
  %v855 = vunpack.c.l.b16 %v67
  %v856 = vunpack.c.l.b16 %v68
  %v857 = vunpack.c.l.b16 %v69
  %v858 = vunpack.c.l.b16 %v70
  %v859 = vunpack.c.l.b16 %v71
  %v860 = vunpack.c.l.b16 %v72
  %v861 = vunpack.c.l.b16 %v73
  %v862 = vunpack.c.l.b16 %v74
  %v863 = vunpack.c.l.b16 %v75
  %v864 = vunpack.c.l.b16 %v76
  %v865 = vunpack.c.l.b16 %v77
  %v866 = vunpack.c.l.b16 %v78
  %v867 = vunpack.c.l.b16 %v79
  %v868 = vunpack.c.l.b16 %v80
  %v869 = vunpack.c.l.b16 %v81
  %v870 = vunpack.c.l.b16 %v82
  %v871 = vunpack.c.l.b16 %v83
  %v872 = vunpack.c.l.b16 %v84
  %v873 = vunpack.c.l.b16 %v85
  %v874 = vunpack.c.l.b16 %v86
  %v875 = vunpack.c.l.b16 %v87
  %v876 = vunpack.c.l.b16 %v88
  %v877 = vunpack.c.l.b16 %v89
  %v878 = vunpack.c.l.b16 %v90
  %v879 = vunpack.c.l.b16 %v91
  %v880 = vunpack.c.l.b16 %v92
  %v881 = vunpack.c.l.b16 %v93
  %v882 = vunpack.c.l.b16 %v94
  %v883 = vunpack.c.l.b16 %v95
  %v884 = vunpack.c.l.b16 %v96
  %v885 = vunpack.c.l.b16 %v97
  %v886 = vunpack.c.l.b16 %v98
  %v887 = vunpack.c.l.b16 %v99
  %v888 = vunpack.c.l.b16 %v100
  %v889 = vunpack.c.l.b16 %v101
  %v890 = vunpack.c.l.b16 %v102
  %v891 = vunpack.c.l.b16 %v103
  %v892 = vunpack.c.l.b16 %v104
  %v893 = vunpack.c.l.b16 %v105
  %v894 = vunpack.c.l.b16 %v106
  %v895 = vunpack.c.l.b16 %v107
  %v896 = vunpack.c.l.b16 %v108
  %v897 = vunpack.c.l.b16 %v109
  %v898 = vunpack.c.l.b16 %v110
  %v899 = vunpack.c.l.b16 %v111
  %v900 = vunpack.c.l.b16 %v112
  %v901 = vunpack.c.l.b16 %v113
  %v902 = vunpack.c.l.b16 %v114
  %v903 = vunpack.c.l.b16 %v115
  %v904 = vunpack.c.l.b16 %v116
  %v905 = vunpack.c.l.b16 %v117
  %v906 = vunpack.c.l.b16 %v118
  %v907 = vunpack.c.l.b16 %v119
  %v908 = vunpack.c.l.b16 %v120
  %v909 = vunpack.c.l.b16 %v121
  %v910 = vunpack.c.l.b16 %v122
  %v911 = vunpack.c.l.b16 %v123
  %v912 = vunpack.c.l.b16 %v124
  %v913 = vunpack.c.l.b16 %v125
  %v914 = vunpack.c.l.b16 %v126
  %v915 = vunpack.c.l.b16 %v127
  %v916 = vunpack.c.l.b16 %v128
  %v917 = vunpack.c.l.b16 %v129
  %v918 = vunpack.c.l.b16 %v130
  %v919 = vunpack.c.l.b16 %v131
  %v920 = vunpack.c.l.b16 %v132
  %v921 = vunpack.c.l.b16 %v133
  %v922 = vunpack.c.l.b16 %v134
  %v923 = vunpack.c.l.b16 %v135
  %v924 = vunpack.c.l.b16 %v136
  %v925 = vunpack.c.l.b16 %v137
  %v926 = vunpack.c.l.b16 %v138
  %v927 = vunpack.c.l.b16 %v139
  %v928 = vunpack.c.l.b16 %v140
  %v929 = vunpack.c.l.b16 %v141
  %v930 = vunpack.c.l.b16 %v142
  %v931 = vunpack.c.l.b16 %v143
  %v932 = vunpack.c.l.b16 %v144
  %v933 = vunpack.c.l.b16 %v145
  %v934 = vunpack.c.l.b16 %v146
  %v935 = vunpack.c.l.b16 %v147
  %v936 = vunpack.c.l.b16 %v148
  %v937 = vunpack.c.l.b16 %v149
  %v938 = vunpack.c.l.b16 %v150
  %v939 = vunpack.c.l.b16 %v151
  %v940 = vunpack.c.l.b16 %v152
  %v941 = vunpack.c.l.b16 %v153
  %v942 = vunpack.c.l.b16 %v154
  %v943 = vunpack.c.l.b16 %v155
  %v944 = vunpack.c.l.b16 %v156
  %v945 = vunpack.c.l.b16 %v157
  %v946 = vunpack.c.l.b16 %v158
  %v947 = vunpack.c.l.b16 %v159
  %v948 = vunpack.c.l.b16 %v160
  %v949 = vunpack.c.l.b16 %v161
  %v950 = vunpack.c.l.b16 %v162
  %v951 = vunpack.c.l.b16 %v163
  %v952 = vunpack.c.l.b16 %v164
  %v953 = vunpack.c.l.b16 %v165
  %v954 = vunpack.c.l.b16 %v166
  %v955 = vunpack.c.l.b16 %v167
  %v956 = vunpack.c.l.b16 %v168
  %v957 = vunpack.c.l.b16 %v169
  %v958 = vunpack.c.l.b16 %v170
  %v959 = vunpack.c.l.b16 %v171
  %v960 = vunpack.c.l.b16 %v172
  %v961 = vunpack.c.l.b16 %v173
  %v962 = vunpack.c.l.b16 %v174
  %v963 = vunpack.c.l.b16 %v175
  %v964 = vunpack.c.l.b16 %v176
  %v965 = vunpack.c.l.b16 %v177
  %v966 = vunpack.c.l.b16 %v178
  %v967 = vunpack.c.l.b16 %v179
  %v968 = vunpack.c.l.b16 %v180
  %v969 = vunpack.c.l.b16 %v181
  %v970 = vunpack.c.l.b16 %v182
  %v971 = vunpack.c.l.b16 %v183
  %v972 = vunpack.c.l.b16 %v184
  %v973 = vunpack.c.l.b16 %v185
  %v974 = vunpack.c.l.b16 %v186
  %v975 = vunpack.c.l.b16 %v187
  %v976 = vunpack.c.l.b16 %v188
  %v977 = vunpack.c.l.b16 %v189
  %v978 = vunpack.c.l.b16 %v190
  %v979 = vunpack.c.l.b16 %v191
  %v980 = vunpack.c.l.b16 %v192
  %v981 = vunpack.c.l.b16 %v193
  %v982 = vunpack.c.l.b16 %v194
  %v983 = vunpack.c.l.b16 %v195
  %v984 = vunpack.c.l.b16 %v196
  %v985 = vunpack.c.l.b16 %v197
  %v986 = vunpack.c.l.b16 %v198
  %v987 = vunpack.c.l.b16 %v199
  %v988 = vunpack.c.l.b16 %v200
  %v989 = vunpack.c.l.b16 %v201
  %v990 = vunpack.c.l.b16 %v202
  %v991 = vunpack.c.l.b16 %v203
  %v992 = vunpack.c.l.b16 %v204
  %v993 = vunpack.c.l.b16 %v205
  %v994 = vunpack.c.l.b16 %v206
  %v995 = vunpack.c.l.b16 %v207
  %v996 = vunpack.c.l.b16 %v208
  %v997 = vunpack.c.l.b16 %v209
  %v998 = vunpack.c.l.b16 %v210
  %v999 = vunpack.c.l.b16 %v211
  %v1000 = vunpack.c.l.b16 %v212
  %v1001 = vunpack.c.l.b16 %v213
  %v1002 = vunpack.c.l.b16 %v214
  %v1003 = vunpack.c.l.b16 %v215
  %v1004 = vunpack.c.l.b16 %v216
  %v1005 = vunpack.c.l.b16 %v217
  %v1006 = vunpack.c.l.b16 %v218
  %v1007 = vunpack.c.l.b16 %v219
  %v1008 = vunpack.c.l.b16 %v220
  %v1009 = vunpack.c.l.b16 %v221
  %v1010 = vunpack.c.l.b16 %v222
  %v1011 = vunpack.c.l.b16 %v223
  %v1012 = vunpack.c.l.b16 %v224
  %v1013 = vunpack.c.l.b16 %v225
  %v1014 = vunpack.c.l.b16 %v226
  %v1015 = vunpack.c.l.b16 %v227
  %v1016 = vunpack.c.l.b16 %v228
  %v1017 = vunpack.c.l.b16 %v229
  %v1018 = vunpack.c.l.b16 %v230
  %v1019 = vunpack.c.l.b16 %v231
  %v1020 = vunpack.c.l.b16 %v232
  %v1021 = vunpack.c.l.b16 %v233
  %v1022 = vunpack.c.l.b16 %v234
  %v1023 = vunpack.c.l.b16 %v235
  %v1024 = vunpack.c.l.b16 %v236
  %v1025 = vunpack.c.l.b16 %v237
  %v1026 = vunpack.c.l.b16 %v238
  %v1027 = vunpack.c.l.b16 %v239
  %v1028 = vunpack.c.l.b16 %v240
  %v1029 = vunpack.c.l.b16 %v241
  %v1030 = vunpack.c.l.b16 %v242
  %v1031 = vunpack.c.l.b16 %v243
  %v1032 = vunpack.c.l.b16 %v244
  %v1033 = vunpack.c.l.b16 %v245
  %v1034 = vunpack.c.l.b16 %v246
  %v1035 = vunpack.c.l.b16 %v247
  %v1036 = vunpack.c.l.b16 %v248
  %v1037 = vunpack.c.l.b16 %v249
  %v1038 = vunpack.c.l.b16 %v250
  %v1039 = vunpack.c.l.b16 %v251
  %v1040 = vunpack.c.l.b16 %v252
  %v1041 = vunpack.c.l.b16 %v253
  %v1042 = vunpack.c.l.b16 %v254
  %v1043 = vunpack.c.l.b16 %v255
  %v1044 = vunpack.c.l.b16 %v256
  %v1045 = vunpack.c.l.b16 %v257
  %v1046 = vunpack.c.l.b16 %v258
  %v1047 = vunpack.c.l.b16 %v259
  %v1048 = vunpack.c.l.b16 %v260
  %v1049 = vunpack.c.l.b16 %v261
  %v1050 = vunpack.c.l.b16 %v262
  %v1051 = vunpack.c.l.b16 %v263
  %v1052 = vunpack.c.l.b16 %v264
  %v1053 = vunpack.c.l.b16 %v265
  %v1054 = vunpack.c.l.b16 %v266
  %v1055 = vunpack.c.l.b16 %v267
  %v1056 = vunpack.c.l.b16 %v268
  %v1057 = vunpack.c.l.b16 %v269
  %v1058 = vunpack.c.l.b16 %v270
  %v1059 = vunpack.c.l.b16 %v271
  %v1060 = vunpack.c.l.b16 %v272
  %v1061 = vunpack.c.l.b16 %v273
  %v1062 = vunpack.c.l.b16 %v274
  %v1063 = vunpack.c.l.b16 %v275
  %v1064 = vunpack.c.l.b16 %v276
  %v1065 = vunpack.c.l.b16 %v277
  %v1066 = vunpack.c.l.b16 %v278
  %v1067 = vunpack.c.l.b16 %v279
  %v1068 = vunpack.c.l.b16 %v280
  %v1069 = vunpack.c.l.b16 %v281
  %v1070 = vunpack.c.l.b16 %v282
  %v1071 = vunpack.c.l.b16 %v283
  %v1072 = vunpack.c.l.b16 %v284
  %v1073 = vunpack.c.l.b16 %v285
  %v1074 = vunpack.c.l.b16 %v286
  %v1075 = vunpack.c.l.b16 %v287
  %v1076 = vunpack.c.l.b16 %v288
  %v1077 = vunpack.c.l.b16 %v289
  %v1078 = vunpack.c.l.b16 %v290
  %v1079 = vunpack.c.l.b16 %v291
  %v1080 = vunpack.c.l.b16 %v292
  %v1081 = vunpack.c.l.b16 %v293
  %v1082 = vunpack.c.l.b16 %v294
  %v1083 = vunpack.c.l.b16 %v295
  %v1084 = vunpack.c.l.b16 %v296
  %v1085 = vunpack.c.l.b16 %v297
  %v1086 = vunpack.c.l.b16 %v298
  %v1087 = vunpack.c.l.b16 %v299
  %v1088 = vunpack.c.l.b16 %v300
  %v1089 = vunpack.c.l.b16 %v301
  %v1090 = vunpack.c.l.b16 %v302
  %v1091 = vunpack.c.l.b16 %v303
  %v1092 = vunpack.c.l.b16 %v304
  %v1093 = vunpack.c.l.b16 %v305
  %v1094 = vunpack.c.l.b16 %v306
  %v1095 = vunpack.c.l.b16 %v307
  %v1096 = vunpack.c.l.b16 %v308
  %v1097 = vunpack.c.l.b16 %v309
  %v1098 = vunpack.c.l.b16 %v310
  %v1099 = vunpack.c.l.b16 %v311
  %v1100 = vunpack.c.l.b16 %v312
  %v1101 = vunpack.c.l.b16 %v313
  %v1102 = vunpack.c.l.b16 %v314
  %v1103 = vunpack.c.l.b16 %v315
  %v1104 = vunpack.c.l.b16 %v316
  %v1105 = vunpack.c.l.b16 %v317
  %v1106 = vunpack.c.l.b16 %v318
  %v1107 = vunpack.c.l.b16 %v319
  %v1108 = vunpack.c.l.b16 %v320
  %v1109 = vunpack.c.l.b16 %v321
  %v1110 = vunpack.c.l.b16 %v322
  %v1111 = vunpack.c.l.b16 %v323
  %v1112 = vunpack.c.l.b16 %v324
  %v1113 = vunpack.c.l.b16 %v325
  %v1114 = vunpack.c.l.b16 %v326
  %v1115 = vunpack.c.l.b16 %v327
  %v1116 = vunpack.c.l.b16 %v328
  %v1117 = vunpack.c.l.b16 %v329
  %v1118 = vunpack.c.l.b16 %v330
  %v1119 = vunpack.c.l.b16 %v331
  %v1120 = vunpack.c.l.b16 %v332
  %v1121 = vunpack.c.l.b16 %v333
  %v1122 = vunpack.c.l.b16 %v334
  %v1123 = vunpack.c.l.b16 %v335
  %v1124 = vunpack.c.l.b16 %v336
  %v1125 = vunpack.c.l.b16 %v337
  %v1126 = vunpack.c.l.b16 %v338
  %v1127 = vunpack.c.l.b16 %v339
  %v1128 = vunpack.c.l.b16 %v340
  %v1129 = vunpack.c.l.b16 %v341
  %v1130 = vunpack.c.l.b16 %v342
  %v1131 = vunpack.c.l.b16 %v343
  %v1132 = vunpack.c.l.b16 %v344
  %v1133 = vunpack.c.l.b16 %v345
  %v1134 = vunpack.c.l.b16 %v346
  %v1135 = vunpack.c.l.b16 %v347
  %v1136 = vunpack.c.l.b16 %v348
  %v1137 = vunpack.c.l.b16 %v349
  %v1138 = vunpack.c.l.b16 %v350
  %v1139 = vunpack.c.l.b16 %v351
  %v1140 = vunpack.c.l.b16 %v352
  %v1141 = vunpack.c.l.b16 %v353
  %v1142 = vunpack.c.l.b16 %v354
  %v1143 = vunpack.c.l.b16 %v355
  %v1144 = vunpack.c.l.b16 %v356
  %v1145 = vunpack.c.l.b16 %v357
  %v1146 = vunpack.c.l.b16 %v358
  %v1147 = vunpack.c.l.b16 %v359
  %v1148 = vunpack.c.l.b16 %v360
  %v1149 = vunpack.c.l.b16 %v361
  %v1150 = vunpack.c.l.b16 %v362
  %v1151 = vunpack.c.l.b16 %v363
  %v1152 = vunpack.c.l.b16 %v364
  %v1153 = vunpack.c.l.b16 %v365
  %v1154 = vunpack.c.l.b16 %v366
  %v1155 = vunpack.c.l.b16 %v367
  %v1156 = vunpack.c.l.b16 %v368
  %v1157 = vunpack.c.l.b16 %v369
  %v1158 = vunpack.c.l.b16 %v370
  %v1159 = vunpack.c.l.b16 %v371
  %v1160 = vunpack.c.l.b16 %v372
  %v1161 = vunpack.c.l.b16 %v373
  %v1162 = vunpack.c.l.b16 %v374
  %v1163 = vunpack.c.l.b16 %v375
  %v1164 = vunpack.c.l.b16 %v376
  %v1165 = vunpack.c.l.b16 %v377
  %v1166 = vunpack.c.l.b16 %v378
  %v1167 = vunpack.c.l.b16 %v379
  %v1168 = vunpack.c.l.b16 %v380
  %v1169 = vunpack.c.l.b16 %v381
  %v1170 = vunpack.c.l.b16 %v382
  %v1171 = vunpack.c.l.b16 %v383
  %v1172 = vpack.c.b16 %v821, %v820
  %v1173 = vpack.c.b16 %v823, %v822
  %v1174 = vpack.c.b16 %v825, %v824
  %v1175 = vpack.c.b16 %v827, %v826
  %v1176 = vpack.c.b16 %v829, %v828
  %v1177 = vpack.c.b16 %v831, %v830
  %v1178 = vpack.c.b16 %v833, %v832
  %v1179 = vpack.c.b16 %v835, %v834
  %v1180 = vpack.c.b16 %v837, %v836
  %v1181 = vpack.c.b16 %v839, %v838
  %v1182 = vpack.c.b16 %v841, %v840
  %v1183 = vpack.c.b16 %v843, %v842
  %v1184 = vpack.c.b16 %v845, %v844
  %v1185 = vpack.c.b16 %v847, %v846
  %v1186 = vpack.c.b16 %v849, %v848
  %v1187 = vpack.c.b16 %v851, %v850
  %v1188 = vpack.c.b16 %v853, %v852
  %v1189 = vpack.c.b16 %v855, %v854
  %v1190 = vpack.c.b16 %v857, %v856
  %v1191 = vpack.c.b16 %v859, %v858
  %v1192 = vpack.c.b16 %v861, %v860
  %v1193 = vpack.c.b16 %v863, %v862
  %v1194 = vpack.c.b16 %v865, %v864
  %v1195 = vpack.c.b16 %v867, %v866
  %v1196 = vpack.c.b16 %v869, %v868
  %v1197 = vpack.c.b16 %v871, %v870
  %v1198 = vpack.c.b16 %v873, %v872
  %v1199 = vpack.c.b16 %v875, %v874
  %v1200 = vpack.c.b16 %v877, %v876
  %v1201 = vpack.c.b16 %v879, %v878
  %v1202 = vpack.c.b16 %v881, %v880
  %v1203 = vpack.c.b16 %v883, %v882
  %v1204 = vpack.c.b16 %v885, %v884
  %v1205 = vpack.c.b16 %v887, %v886
  %v1206 = vpack.c.b16 %v889, %v888
  %v1207 = vpack.c.b16 %v891, %v890
  %v1208 = vpack.c.b16 %v893, %v892
  %v1209 = vpack.c.b16 %v895, %v894
  %v1210 = vpack.c.b16 %v897, %v896
  %v1211 = vpack.c.b16 %v899, %v898
  %v1212 = vpack.c.b16 %v901, %v900
  %v1213 = vpack.c.b16 %v903, %v902
  %v1214 = vpack.c.b16 %v905, %v904
  %v1215 = vpack.c.b16 %v907, %v906
  %v1216 = vpack.c.b16 %v909, %v908
  %v1217 = vpack.c.b16 %v911, %v910
  %v1218 = vpack.c.b16 %v913, %v912
  %v1219 = vpack.c.b16 %v915, %v914
  %v1220 = vpack.c.b16 %v917, %v916
  %v1221 = vpack.c.b16 %v919, %v918
  %v1222 = vpack.c.b16 %v921, %v920
  %v1223 = vpack.c.b16 %v923, %v922
  %v1224 = vpack.c.b16 %v925, %v924
  %v1225 = vpack.c.b16 %v927, %v926
  %v1226 = vpack.c.b16 %v929, %v928
  %v1227 = vpack.c.b16 %v931, %v930
  %v1228 = vpack.c.b16 %v933, %v932
  %v1229 = vpack.c.b16 %v935, %v934
  %v1230 = vpack.c.b16 %v937, %v936
  %v1231 = vpack.c.b16 %v939, %v938
  %v1232 = vpack.c.b16 %v941, %v940
  %v1233 = vpack.c.b16 %v943, %v942
  %v1234 = vpack.c.b16 %v945, %v944
  %v1235 = vpack.c.b16 %v947, %v946
  %v1236 = vpack.c.b16 %v949, %v948
  %v1237 = vpack.c.b16 %v951, %v950
  %v1238 = vpack.c.b16 %v953, %v952
  %v1239 = vpack.c.b16 %v955, %v954
  %v1240 = vpack.c.b16 %v957, %v956
  %v1241 = vpack.c.b16 %v959, %v958
  %v1242 = vpack.c.b16 %v961, %v960
  %v1243 = vpack.c.b16 %v963, %v962
  %v1244 = vpack.c.b16 %v965, %v964
  %v1245 = vpack.c.b16 %v967, %v966
  %v1246 = vpack.c.b16 %v969, %v968
  %v1247 = vpack.c.b16 %v971, %v970
  %v1248 = vpack.c.b16 %v973, %v972
  %v1249 = vpack.c.b16 %v975, %v974
  %v1250 = vpack.c.b16 %v977, %v976
  %v1251 = vpack.c.b16 %v979, %v978
  %v1252 = vpack.c.b16 %v981, %v980
  %v1253 = vpack.c.b16 %v983, %v982
  %v1254 = vpack.c.b16 %v985, %v984
  %v1255 = vpack.c.b16 %v987, %v986
  %v1256 = vpack.c.b16 %v989, %v988
  %v1257 = vpack.c.b16 %v991, %v990
  %v1258 = vpack.c.b16 %v993, %v992
  %v1259 = vpack.c.b16 %v995, %v994
  %v1260 = vpack.c.b16 %v997, %v996
  %v1261 = vpack.c.b16 %v999, %v998
  %v1262 = vpack.c.b16 %v1001, %v1000
  %v1263 = vpack.c.b16 %v1003, %v1002
  %v1264 = vpack.c.b16 %v1005, %v1004
  %v1265 = vpack.c.b16 %v1007, %v1006
  %v1266 = vpack.c.b16 %v1009, %v1008
  %v1267 = vpack.c.b16 %v1011, %v1010
  %v1268 = vpack.c.b16 %v1013, %v1012
  %v1269 = vpack.c.b16 %v1015, %v1014
  %v1270 = vpack.c.b16 %v1017, %v1016
  %v1271 = vpack.c.b16 %v1019, %v1018
  %v1272 = vpack.c.b16 %v1021, %v1020
  %v1273 = vpack.c.b16 %v1023, %v1022
  %v1274 = vpack.c.b16 %v1025, %v1024
  %v1275 = vpack.c.b16 %v1027, %v1026
  %v1276 = vpack.c.b16 %v1029, %v1028
  %v1277 = vpack.c.b16 %v1031, %v1030
  %v1278 = vpack.c.b16 %v1033, %v1032
  %v1279 = vpack.c.b16 %v1035, %v1034
  %v1280 = vpack.c.b16 %v1037, %v1036
  %v1281 = vpack.c.b16 %v1039, %v1038
  %v1282 = vpack.c.b16 %v1041, %v1040
  %v1283 = vpack.c.b16 %v1043, %v1042
  %v1284 = vpack.c.b16 %v1045, %v1044
  %v1285 = vpack.c.b16 %v1047, %v1046
  %v1286 = vpack.c.b16 %v1049, %v1048
  %v1287 = vpack.c.b16 %v1051, %v1050
  %v1288 = vpack.c.b16 %v1053, %v1052
  %v1289 = vpack.c.b16 %v1055, %v1054
  %v1290 = vpack.c.b16 %v1057, %v1056
  %v1291 = vpack.c.b16 %v1059, %v1058
  %v1292 = vpack.c.b16 %v1061, %v1060
  %v1293 = vpack.c.b16 %v1063, %v1062
  %v1294 = vpack.c.b16 %v1065, %v1064
  %v1295 = vpack.c.b16 %v1067, %v1066
  %v1296 = vpack.c.b16 %v1069, %v1068
  %v1297 = vpack.c.b16 %v1071, %v1070
  %v1298 = vpack.c.b16 %v1073, %v1072
  %v1299 = vpack.c.b16 %v1075, %v1074
  %v1300 = vpack.c.b16 %v1077, %v1076
  %v1301 = vpack.c.b16 %v1079, %v1078
  %v1302 = vpack.c.b16 %v1081, %v1080
  %v1303 = vpack.c.b16 %v1083, %v1082
  %v1304 = vpack.c.b16 %v1085, %v1084
  %v1305 = vpack.c.b16 %v1087, %v1086
  %v1306 = vpack.c.b16 %v1089, %v1088
  %v1307 = vpack.c.b16 %v1091, %v1090
  %v1308 = vpack.c.b16 %v1093, %v1092
  %v1309 = vpack.c.b16 %v1095, %v1094
  %v1310 = vpack.c.b16 %v1097, %v1096
  %v1311 = vpack.c.b16 %v1099, %v1098
  %v1312 = vpack.c.b16 %v1101, %v1100
  %v1313 = vpack.c.b16 %v1103, %v1102
  %v1314 = vpack.c.b16 %v1105, %v1104
  %v1315 = vpack.c.b16 %v1107, %v1106
  %v1316 = vpack.c.b16 %v1109, %v1108
  %v1317 = vpack.c.b16 %v1111, %v1110
  %v1318 = vpack.c.b16 %v1113, %v1112
  %v1319 = vpack.c.b16 %v1115, %v1114
  %v1320 = vpack.c.b16 %v1117, %v1116
  %v1321 = vpack.c.b16 %v1119, %v1118
  %v1322 = vpack.c.b16 %v1121, %v1120
  %v1323 = vpack.c.b16 %v1123, %v1122
  %v1324 = vpack.c.b16 %v1125, %v1124
  %v1325 = vpack.c.b16 %v1127, %v1126
  %v1326 = vpack.c.b16 %v1129, %v1128
  %v1327 = vpack.c.b16 %v1131, %v1130
  %v1328 = vpack.c.b16 %v1133, %v1132
  %v1329 = vpack.c.b16 %v1135, %v1134
  %v1330 = vpack.c.b16 %v1137, %v1136
  %v1331 = vpack.c.b16 %v1139, %v1138
  %v1332 = vpack.c.b16 %v1141, %v1140
  %v1333 = vpack.c.b16 %v1143, %v1142
  %v1334 = vpack.c.b16 %v1145, %v1144
  %v1335 = vpack.c.b16 %v1147, %v1146
  %v1336 = vpack.c.b16 %v1149, %v1148
  %v1337 = vpack.c.b16 %v1151, %v1150
  %v1338 = vpack.c.b16 %v1153, %v1152
  %v1339 = vpack.c.b16 %v1155, %v1154
  %v1340 = vpack.c.b16 %v1157, %v1156
  %v1341 = vpack.c.b16 %v1159, %v1158
  %v1342 = vpack.c.b16 %v1161, %v1160
  %v1343 = vpack.c.b16 %v1163, %v1162
  %v1344 = vpack.c.b16 %v1165, %v1164
  %v1345 = vpack.c.b16 %v1167, %v1166
  %v1346 = vpack.c.b16 %v1169, %v1168
  %v1347 = vpack.c.b16 %v1171, %v1170
  %1524 = vmatprep.subr.bf16.mxu0 0
  %1525 = vmatpush1.bf16.msra.mxu0 %v1172
  %1526 = vmatprep.subr.bf16.mxu0 0
  %1527 = vmatpush1.bf16.msra.mxu0 %v1173
  %1528 = vmatprep.subr.bf16.mxu0 0
  %1529 = vmatpush1.bf16.msra.mxu0 %v1174
  %1530 = vmatprep.subr.bf16.mxu0 0
  %1531 = vmatpush1.bf16.msra.mxu0 %v1175
  %1532 = vmatprep.subr.bf16.mxu0 0
  %1533 = vmatpush1.bf16.msra.mxu0 %v1176
  %1534 = vmatprep.subr.bf16.mxu0 0
  %1535 = vmatpush1.bf16.msra.mxu0 %v1177
  %1536 = vmatprep.subr.bf16.mxu0 0
  %1537 = vmatpush1.bf16.msra.mxu0 %v1178
  %1538 = vmatprep.subr.bf16.mxu0 0
  %1539 = vmatpush1.bf16.msra.mxu0 %v1179
  %1540 = vmatprep.subr.bf16.mxu0 0
  %1541 = vmatpush1.bf16.msra.mxu0 %v1180
  %1542 = vmatprep.subr.bf16.mxu0 0
  %1543 = vmatpush1.bf16.msra.mxu0 %v1181
  %1544 = vmatprep.subr.bf16.mxu0 0
  %1545 = vmatpush1.bf16.msra.mxu0 %v1182
  %1546 = vmatprep.subr.bf16.mxu0 0
  %1547 = vmatpush1.bf16.msra.mxu0 %v1183
  %1548 = vmatprep.subr.bf16.mxu0 0
  %1549 = vmatpush1.bf16.msra.mxu0 %v1184
  %1550 = vmatprep.subr.bf16.mxu0 0
  %1551 = vmatpush1.bf16.msra.mxu0 %v1185
  %1552 = vmatprep.subr.bf16.mxu0 0
  %1553 = vmatpush1.bf16.msra.mxu0 %v1186
  %1554 = vmatprep.subr.bf16.mxu0 0
  %1555 = vmatpush1.bf16.msra.mxu0 %v1187
  %1556 = vmatprep.mubr.bf16.mxu0 %v425
  %1557 = vmatmul.mubr.bf16.gmra.mrb[0].mxu0 %v424
  %v1558 = vpop.f32.mrb[0].mxu0
  %v1559 = vadd.f32 %v389, %v1558
  %v1560 = vpop.f32.mrb[0].mxu0
  %v1561 = vpop.f32.mrb[0].mxu0
  %v1562 = vpop.f32.mrb[0].mxu0
  %1563 = vdwg.mxu0
  %1564 = vmatprep.subr.bf16.mxu0 0
  %1565 = vmatpush1.bf16.msra.mxu0 %v1188
  %1566 = vmatprep.subr.bf16.mxu0 0
  %1567 = vmatpush1.bf16.msra.mxu0 %v1189
  %1568 = vmatprep.subr.bf16.mxu0 0
  %1569 = vmatpush1.bf16.msra.mxu0 %v1190
  %1570 = vmatprep.subr.bf16.mxu0 0
  %1571 = vmatpush1.bf16.msra.mxu0 %v1191
  %1572 = vmatprep.subr.bf16.mxu0 0
  %1573 = vmatpush1.bf16.msra.mxu0 %v1192
  %1574 = vmatprep.subr.bf16.mxu0 0
  %1575 = vmatpush1.bf16.msra.mxu0 %v1193
  %1576 = vmatprep.subr.bf16.mxu0 0
  %1577 = vmatpush1.bf16.msra.mxu0 %v1194
  %1578 = vmatprep.subr.bf16.mxu0 0
  %1579 = vmatpush1.bf16.msra.mxu0 %v1195
  %1580 = vmatprep.subr.bf16.mxu0 0
  %1581 = vmatpush1.bf16.msra.mxu0 %v1196
  %1582 = vmatprep.subr.bf16.mxu0 0
  %1583 = vmatpush1.bf16.msra.mxu0 %v1197
  %1584 = vmatprep.subr.bf16.mxu0 0
  %1585 = vmatpush1.bf16.msra.mxu0 %v1198
  %1586 = vmatprep.subr.bf16.mxu0 0
  %1587 = vmatpush1.bf16.msra.mxu0 %v1199
  %1588 = vmatprep.subr.bf16.mxu0 0
  %1589 = vmatpush1.bf16.msra.mxu0 %v1200
  %1590 = vmatprep.subr.bf16.mxu0 0
  %1591 = vmatpush1.bf16.msra.mxu0 %v1201
  %1592 = vmatprep.subr.bf16.mxu0 0
  %1593 = vmatpush1.bf16.msra.mxu0 %v1202
  %1594 = vmatprep.subr.bf16.mxu0 0
  %1595 = vmatpush1.bf16.msra.mxu0 %v1203
  %1596 = vmatprep.mubr.bf16.mxu0 %v427
  %1597 = vmatmul.mubr.bf16.gmra.mrb[0].mxu0 %v426
  %v1598 = vpop.f32.mrb[0].mxu0
  %v1599 = vadd.f32 %v1559, %v1598
  %v1600 = vpop.f32.mrb[0].mxu0
  %v1601 = vpop.f32.mrb[0].mxu0
  %v1602 = vpop.f32.mrb[0].mxu0
  %1603 = vdwg.mxu0
  %1604 = vmatprep.subr.bf16.mxu0 0
  %1605 = vmatpush1.bf16.msra.mxu0 %v1204
  %1606 = vmatprep.subr.bf16.mxu0 0
  %1607 = vmatpush1.bf16.msra.mxu0 %v1205
  %1608 = vmatprep.subr.bf16.mxu0 0
  %1609 = vmatpush1.bf16.msra.mxu0 %v1206
  %1610 = vmatprep.subr.bf16.mxu0 0
  %1611 = vmatpush1.bf16.msra.mxu0 %v1207
  %1612 = vmatprep.subr.bf16.mxu0 0
  %1613 = vmatpush1.bf16.msra.mxu0 %v1208
  %1614 = vmatprep.subr.bf16.mxu0 0
  %1615 = vmatpush1.bf16.msra.mxu0 %v1209
  %1616 = vmatprep.subr.bf16.mxu0 0
  %1617 = vmatpush1.bf16.msra.mxu0 %v1210
  %1618 = vmatprep.subr.bf16.mxu0 0
  %1619 = vmatpush1.bf16.msra.mxu0 %v1211
  %1620 = vmatprep.subr.bf16.mxu0 0
  %1621 = vmatpush1.bf16.msra.mxu0 %v1212
  %1622 = vmatprep.subr.bf16.mxu0 0
  %1623 = vmatpush1.bf16.msra.mxu0 %v1213
  %1624 = vmatprep.subr.bf16.mxu0 0
  %1625 = vmatpush1.bf16.msra.mxu0 %v1214
  %1626 = vmatprep.subr.bf16.mxu0 0
  %1627 = vmatpush1.bf16.msra.mxu0 %v1215
  %1628 = vmatprep.subr.bf16.mxu0 0
  %1629 = vmatpush1.bf16.msra.mxu0 %v1216
  %1630 = vmatprep.subr.bf16.mxu0 0
  %1631 = vmatpush1.bf16.msra.mxu0 %v1217
  %1632 = vmatprep.subr.bf16.mxu0 0
  %1633 = vmatpush1.bf16.msra.mxu0 %v1218
  %1634 = vmatprep.subr.bf16.mxu0 0
  %1635 = vmatpush1.bf16.msra.mxu0 %v1219
  %1636 = vmatprep.mubr.bf16.mxu0 %v429
  %1637 = vmatmul.mubr.bf16.gmra.mrb[0].mxu0 %v428
  %v1638 = vpop.f32.mrb[0].mxu0
  %v1639 = vadd.f32 %v1599, %v1638
  %v1640 = vpop.f32.mrb[0].mxu0
  %v1641 = vpop.f32.mrb[0].mxu0
  %v1642 = vpop.f32.mrb[0].mxu0
  %1643 = vdwg.mxu0
  %1644 = vmatprep.subr.bf16.mxu0 0
  %1645 = vmatpush1.bf16.msra.mxu0 %v1220
  %1646 = vmatprep.subr.bf16.mxu0 0
  %1647 = vmatpush1.bf16.msra.mxu0 %v1221
  %1648 = vmatprep.subr.bf16.mxu0 0
  %1649 = vmatpush1.bf16.msra.mxu0 %v1222
  %1650 = vmatprep.subr.bf16.mxu0 0
  %1651 = vmatpush1.bf16.msra.mxu0 %v1223
  %1652 = vmatprep.subr.bf16.mxu0 0
  %1653 = vmatpush1.bf16.msra.mxu0 %v1224
  %1654 = vmatprep.subr.bf16.mxu0 0
  %1655 = vmatpush1.bf16.msra.mxu0 %v1225
  %1656 = vmatprep.subr.bf16.mxu0 0
  %1657 = vmatpush1.bf16.msra.mxu0 %v1226
  %1658 = vmatprep.subr.bf16.mxu0 0
  %1659 = vmatpush1.bf16.msra.mxu0 %v1227
  %1660 = vmatprep.subr.bf16.mxu0 0
  %1661 = vmatpush1.bf16.msra.mxu0 %v1228
  %1662 = vmatprep.subr.bf16.mxu0 0
  %1663 = vmatpush1.bf16.msra.mxu0 %v1229
  %1664 = vmatprep.subr.bf16.mxu0 0
  %1665 = vmatpush1.bf16.msra.mxu0 %v1230
  %1666 = vmatprep.subr.bf16.mxu0 0
  %1667 = vmatpush1.bf16.msra.mxu0 %v1231
  %1668 = vmatprep.subr.bf16.mxu0 0
  %1669 = vmatpush1.bf16.msra.mxu0 %v1232
  %1670 = vmatprep.subr.bf16.mxu0 0
  %1671 = vmatpush1.bf16.msra.mxu0 %v1233
  %1672 = vmatprep.subr.bf16.mxu0 0
  %1673 = vmatpush1.bf16.msra.mxu0 %v1234
  %1674 = vmatprep.subr.bf16.mxu0 0
  %1675 = vmatpush1.bf16.msra.mxu0 %v1235
  %1676 = vmatprep.mubr.bf16.mxu0 %v431
  %1677 = vmatmul.mubr.bf16.gmra.mrb[0].mxu0 %v430
  %v1678 = vpop.f32.mrb[0].mxu0
  %v1679 = vadd.f32 %v1639, %v1678
  %v1680 = vpop.f32.mrb[0].mxu0
  %v1681 = vpop.f32.mrb[0].mxu0
  %v1682 = vpop.f32.mrb[0].mxu0
  %1683 = vdwg.mxu0
  %1684 = vmatprep.subr.bf16.mxu0 0
  %1685 = vmatpush1.bf16.msra.mxu0 %v1236
  %1686 = vmatprep.subr.bf16.mxu0 0
  %1687 = vmatpush1.bf16.msra.mxu0 %v1237
  %1688 = vmatprep.subr.bf16.mxu0 0
  %1689 = vmatpush1.bf16.msra.mxu0 %v1238
  %1690 = vmatprep.subr.bf16.mxu0 0
  %1691 = vmatpush1.bf16.msra.mxu0 %v1239
  %1692 = vmatprep.subr.bf16.mxu0 0
  %1693 = vmatpush1.bf16.msra.mxu0 %v1240
  %1694 = vmatprep.subr.bf16.mxu0 0
  %1695 = vmatpush1.bf16.msra.mxu0 %v1241
  %1696 = vmatprep.subr.bf16.mxu0 0
  %1697 = vmatpush1.bf16.msra.mxu0 %v1242
  %1698 = vmatprep.subr.bf16.mxu0 0
  %1699 = vmatpush1.bf16.msra.mxu0 %v1243
  %1700 = vmatprep.subr.bf16.mxu0 0
  %1701 = vmatpush1.bf16.msra.mxu0 %v1244
  %1702 = vmatprep.subr.bf16.mxu0 0
  %1703 = vmatpush1.bf16.msra.mxu0 %v1245
  %1704 = vmatprep.subr.bf16.mxu0 0
  %1705 = vmatpush1.bf16.msra.mxu0 %v1246
  %1706 = vmatprep.subr.bf16.mxu0 0
  %1707 = vmatpush1.bf16.msra.mxu0 %v1247
  %1708 = vmatprep.subr.bf16.mxu0 0
  %1709 = vmatpush1.bf16.msra.mxu0 %v1248
  %1710 = vmatprep.subr.bf16.mxu0 0
  %1711 = vmatpush1.bf16.msra.mxu0 %v1249
  %1712 = vmatprep.subr.bf16.mxu0 0
  %1713 = vmatpush1.bf16.msra.mxu0 %v1250
  %1714 = vmatprep.subr.bf16.mxu0 0
  %1715 = vmatpush1.bf16.msra.mxu0 %v1251
  %1716 = vmatprep.mubr.bf16.mxu0 %v433
  %1717 = vmatmul.mubr.bf16.gmra.mrb[0].mxu0 %v432
  %v1718 = vpop.f32.mrb[0].mxu0
  %v1719 = vadd.f32 %v1679, %v1718
  %v1720 = vpop.f32.mrb[0].mxu0
  %v1721 = vpop.f32.mrb[0].mxu0
  %v1722 = vpop.f32.mrb[0].mxu0
  %1723 = vdwg.mxu0
  %1724 = vmatprep.subr.bf16.mxu0 0
  %1725 = vmatpush1.bf16.msra.mxu0 %v1252
  %1726 = vmatprep.subr.bf16.mxu0 0
  %1727 = vmatpush1.bf16.msra.mxu0 %v1253
  %1728 = vmatprep.subr.bf16.mxu0 0
  %1729 = vmatpush1.bf16.msra.mxu0 %v1254
  %1730 = vmatprep.subr.bf16.mxu0 0
  %1731 = vmatpush1.bf16.msra.mxu0 %v1255
  %1732 = vmatprep.subr.bf16.mxu0 0
  %1733 = vmatpush1.bf16.msra.mxu0 %v1256
  %1734 = vmatprep.subr.bf16.mxu0 0
  %1735 = vmatpush1.bf16.msra.mxu0 %v1257
  %1736 = vmatprep.subr.bf16.mxu0 0
  %1737 = vmatpush1.bf16.msra.mxu0 %v1258
  %1738 = vmatprep.subr.bf16.mxu0 0
  %1739 = vmatpush1.bf16.msra.mxu0 %v1259
  %1740 = vmatprep.subr.bf16.mxu0 0
  %1741 = vmatpush1.bf16.msra.mxu0 %v1260
  %1742 = vmatprep.subr.bf16.mxu0 0
  %1743 = vmatpush1.bf16.msra.mxu0 %v1261
  %1744 = vmatprep.subr.bf16.mxu0 0
  %1745 = vmatpush1.bf16.msra.mxu0 %v1262
  %1746 = vmatprep.subr.bf16.mxu0 0
  %1747 = vmatpush1.bf16.msra.mxu0 %v1263
  %1748 = vmatprep.subr.bf16.mxu0 0
  %1749 = vmatpush1.bf16.msra.mxu0 %v1264
  %1750 = vmatprep.subr.bf16.mxu0 0
  %1751 = vmatpush1.bf16.msra.mxu0 %v1265
  %1752 = vmatprep.subr.bf16.mxu0 0
  %1753 = vmatpush1.bf16.msra.mxu0 %v1266
  %1754 = vmatprep.subr.bf16.mxu0 0
  %1755 = vmatpush1.bf16.msra.mxu0 %v1267
  %1756 = vmatprep.mubr.bf16.mxu0 %v435
  %1757 = vmatmul.mubr.bf16.gmra.mrb[0].mxu0 %v434
  %v1758 = vpop.f32.mrb[0].mxu0
  %v1759 = vadd.f32 %v1719, %v1758
  %v1760 = vpop.f32.mrb[0].mxu0
  %v1761 = vpop.f32.mrb[0].mxu0
  %v1762 = vpop.f32.mrb[0].mxu0
  %1763 = vdwg.mxu0
  %1764 = vmatprep.subr.bf16.mxu0 0
  %1765 = vmatpush1.bf16.msra.mxu0 %v1268
  %1766 = vmatprep.subr.bf16.mxu0 0
  %1767 = vmatpush1.bf16.msra.mxu0 %v1269
  %1768 = vmatprep.subr.bf16.mxu0 0
  %1769 = vmatpush1.bf16.msra.mxu0 %v1270
  %1770 = vmatprep.subr.bf16.mxu0 0
  %1771 = vmatpush1.bf16.msra.mxu0 %v1271
  %1772 = vmatprep.subr.bf16.mxu0 0
  %1773 = vmatpush1.bf16.msra.mxu0 %v1272
  %1774 = vmatprep.subr.bf16.mxu0 0
  %1775 = vmatpush1.bf16.msra.mxu0 %v1273
  %1776 = vmatprep.subr.bf16.mxu0 0
  %1777 = vmatpush1.bf16.msra.mxu0 %v1274
  %1778 = vmatprep.subr.bf16.mxu0 0
  %1779 = vmatpush1.bf16.msra.mxu0 %v1275
  %1780 = vmatprep.subr.bf16.mxu0 0
  %1781 = vmatpush1.bf16.msra.mxu0 %v1276
  %1782 = vmatprep.subr.bf16.mxu0 0
  %1783 = vmatpush1.bf16.msra.mxu0 %v1277
  %1784 = vmatprep.subr.bf16.mxu0 0
  %1785 = vmatpush1.bf16.msra.mxu0 %v1278
  %1786 = vmatprep.subr.bf16.mxu0 0
  %1787 = vmatpush1.bf16.msra.mxu0 %v1279
  %1788 = vmatprep.subr.bf16.mxu0 0
  %1789 = vmatpush1.bf16.msra.mxu0 %v1280
  %1790 = vmatprep.subr.bf16.mxu0 0
  %1791 = vmatpush1.bf16.msra.mxu0 %v1281
  %1792 = vmatprep.subr.bf16.mxu0 0
  %1793 = vmatpush1.bf16.msra.mxu0 %v1282
  %1794 = vmatprep.subr.bf16.mxu0 0
  %1795 = vmatpush1.bf16.msra.mxu0 %v1283
  %1796 = vmatprep.mubr.bf16.mxu0 %v437
  %1797 = vmatmul.mubr.bf16.gmra.mrb[0].mxu0 %v436
  %v1798 = vpop.f32.mrb[0].mxu0
  %v1799 = vadd.f32 %v1759, %v1798
  %v1800 = vpop.f32.mrb[0].mxu0
  %v1801 = vpop.f32.mrb[0].mxu0
  %v1802 = vpop.f32.mrb[0].mxu0
  %1803 = vdwg.mxu0
  %1804 = vmatprep.subr.bf16.mxu0 0
  %1805 = vmatpush1.bf16.msra.mxu0 %v1284
  %1806 = vmatprep.subr.bf16.mxu0 0
  %1807 = vmatpush1.bf16.msra.mxu0 %v1285
  %1808 = vmatprep.subr.bf16.mxu0 0
  %1809 = vmatpush1.bf16.msra.mxu0 %v1286
  %1810 = vmatprep.subr.bf16.mxu0 0
  %1811 = vmatpush1.bf16.msra.mxu0 %v1287
  %1812 = vmatprep.subr.bf16.mxu0 0
  %1813 = vmatpush1.bf16.msra.mxu0 %v1288
  %1814 = vmatprep.subr.bf16.mxu0 0
  %1815 = vmatpush1.bf16.msra.mxu0 %v1289
  %1816 = vmatprep.subr.bf16.mxu0 0
  %1817 = vmatpush1.bf16.msra.mxu0 %v1290
  %1818 = vmatprep.subr.bf16.mxu0 0
  %1819 = vmatpush1.bf16.msra.mxu0 %v1291
  %1820 = vmatprep.subr.bf16.mxu0 0
  %1821 = vmatpush1.bf16.msra.mxu0 %v1292
  %1822 = vmatprep.subr.bf16.mxu0 0
  %1823 = vmatpush1.bf16.msra.mxu0 %v1293
  %1824 = vmatprep.subr.bf16.mxu0 0
  %1825 = vmatpush1.bf16.msra.mxu0 %v1294
  %1826 = vmatprep.subr.bf16.mxu0 0
  %1827 = vmatpush1.bf16.msra.mxu0 %v1295
  %1828 = vmatprep.subr.bf16.mxu0 0
  %1829 = vmatpush1.bf16.msra.mxu0 %v1296
  %1830 = vmatprep.subr.bf16.mxu0 0
  %1831 = vmatpush1.bf16.msra.mxu0 %v1297
  %1832 = vmatprep.subr.bf16.mxu0 0
  %1833 = vmatpush1.bf16.msra.mxu0 %v1298
  %1834 = vmatprep.subr.bf16.mxu0 0
  %1835 = vmatpush1.bf16.msra.mxu0 %v1299
  %1836 = vmatprep.mubr.bf16.mxu0 %v439
  %1837 = vmatmul.mubr.bf16.gmra.mrb[0].mxu0 %v438
  %v1838 = vpop.f32.mrb[0].mxu0
  %v1839 = vadd.f32 %v1799, %v1838
  %v1840 = vpop.f32.mrb[0].mxu0
  %v1841 = vpop.f32.mrb[0].mxu0
  %v1842 = vpop.f32.mrb[0].mxu0
  %1843 = vdwg.mxu0
  %1844 = vmatprep.subr.bf16.mxu0 0
  %1845 = vmatpush1.bf16.msra.mxu0 %v1300
  %1846 = vmatprep.subr.bf16.mxu0 0
  %1847 = vmatpush1.bf16.msra.mxu0 %v1301
  %1848 = vmatprep.subr.bf16.mxu0 0
  %1849 = vmatpush1.bf16.msra.mxu0 %v1302
  %1850 = vmatprep.subr.bf16.mxu0 0
  %1851 = vmatpush1.bf16.msra.mxu0 %v1303
  %1852 = vmatprep.subr.bf16.mxu0 0
  %1853 = vmatpush1.bf16.msra.mxu0 %v1304
  %1854 = vmatprep.subr.bf16.mxu0 0
  %1855 = vmatpush1.bf16.msra.mxu0 %v1305
  %1856 = vmatprep.subr.bf16.mxu0 0
  %1857 = vmatpush1.bf16.msra.mxu0 %v1306
  %1858 = vmatprep.subr.bf16.mxu0 0
  %1859 = vmatpush1.bf16.msra.mxu0 %v1307
  %1860 = vmatprep.subr.bf16.mxu0 0
  %1861 = vmatpush1.bf16.msra.mxu0 %v1308
  %1862 = vmatprep.subr.bf16.mxu0 0
  %1863 = vmatpush1.bf16.msra.mxu0 %v1309
  %1864 = vmatprep.subr.bf16.mxu0 0
  %1865 = vmatpush1.bf16.msra.mxu0 %v1310
  %1866 = vmatprep.subr.bf16.mxu0 0
  %1867 = vmatpush1.bf16.msra.mxu0 %v1311
  %1868 = vmatprep.subr.bf16.mxu0 0
  %1869 = vmatpush1.bf16.msra.mxu0 %v1312
  %1870 = vmatprep.subr.bf16.mxu0 0
  %1871 = vmatpush1.bf16.msra.mxu0 %v1313
  %1872 = vmatprep.subr.bf16.mxu0 0
  %1873 = vmatpush1.bf16.msra.mxu0 %v1314
  %1874 = vmatprep.subr.bf16.mxu0 0
  %1875 = vmatpush1.bf16.msra.mxu0 %v1315
  %1876 = vmatprep.mubr.bf16.mxu0 %v441
  %1877 = vmatmul.mubr.bf16.gmra.mrb[0].mxu0 %v440
  %v1878 = vpop.f32.mrb[0].mxu0
  %v1879 = vadd.f32 %v1839, %v1878
  %v1880 = vpop.f32.mrb[0].mxu0
  %v1881 = vpop.f32.mrb[0].mxu0
  %v1882 = vpop.f32.mrb[0].mxu0
  %1883 = vdwg.mxu0
  %1884 = vmatprep.subr.bf16.mxu0 0
  %1885 = vmatpush1.bf16.msra.mxu0 %v1316
  %1886 = vmatprep.subr.bf16.mxu0 0
  %1887 = vmatpush1.bf16.msra.mxu0 %v1317
  %1888 = vmatprep.subr.bf16.mxu0 0
  %1889 = vmatpush1.bf16.msra.mxu0 %v1318
  %1890 = vmatprep.subr.bf16.mxu0 0
  %1891 = vmatpush1.bf16.msra.mxu0 %v1319
  %1892 = vmatprep.subr.bf16.mxu0 0
  %1893 = vmatpush1.bf16.msra.mxu0 %v1320
  %1894 = vmatprep.subr.bf16.mxu0 0
  %1895 = vmatpush1.bf16.msra.mxu0 %v1321
  %1896 = vmatprep.subr.bf16.mxu0 0
  %1897 = vmatpush1.bf16.msra.mxu0 %v1322
  %1898 = vmatprep.subr.bf16.mxu0 0
  %1899 = vmatpush1.bf16.msra.mxu0 %v1323
  %1900 = vmatprep.subr.bf16.mxu0 0
  %1901 = vmatpush1.bf16.msra.mxu0 %v1324
  %1902 = vmatprep.subr.bf16.mxu0 0
  %1903 = vmatpush1.bf16.msra.mxu0 %v1325
  %1904 = vmatprep.subr.bf16.mxu0 0
  %1905 = vmatpush1.bf16.msra.mxu0 %v1326
  %1906 = vmatprep.subr.bf16.mxu0 0
  %1907 = vmatpush1.bf16.msra.mxu0 %v1327
  %1908 = vmatprep.subr.bf16.mxu0 0
  %1909 = vmatpush1.bf16.msra.mxu0 %v1328
  %1910 = vmatprep.subr.bf16.mxu0 0
  %1911 = vmatpush1.bf16.msra.mxu0 %v1329
  %1912 = vmatprep.subr.bf16.mxu0 0
  %1913 = vmatpush1.bf16.msra.mxu0 %v1330
  %1914 = vmatprep.subr.bf16.mxu0 0
  %1915 = vmatpush1.bf16.msra.mxu0 %v1331
  %1916 = vmatprep.mubr.bf16.mxu0 %v443
  %1917 = vmatmul.mubr.bf16.gmra.mrb[0].mxu0 %v442
  %v1918 = vpop.f32.mrb[0].mxu0
  %v1919 = vadd.f32 %v1879, %v1918
  %v1920 = vpop.f32.mrb[0].mxu0
  %v1921 = vpop.f32.mrb[0].mxu0
  %v1922 = vpop.f32.mrb[0].mxu0
  %1923 = vdwg.mxu0
  %1924 = vmatprep.subr.bf16.mxu0 0
  %1925 = vmatpush1.bf16.msra.mxu0 %v1332
  %1926 = vmatprep.subr.bf16.mxu0 0
  %1927 = vmatpush1.bf16.msra.mxu0 %v1333
  %1928 = vmatprep.subr.bf16.mxu0 0
  %1929 = vmatpush1.bf16.msra.mxu0 %v1334
  %1930 = vmatprep.subr.bf16.mxu0 0
  %1931 = vmatpush1.bf16.msra.mxu0 %v1335
  %1932 = vmatprep.subr.bf16.mxu0 0
  %1933 = vmatpush1.bf16.msra.mxu0 %v1336
  %1934 = vmatprep.subr.bf16.mxu0 0
  %1935 = vmatpush1.bf16.msra.mxu0 %v1337
  %1936 = vmatprep.subr.bf16.mxu0 0
  %1937 = vmatpush1.bf16.msra.mxu0 %v1338
  %1938 = vmatprep.subr.bf16.mxu0 0
  %1939 = vmatpush1.bf16.msra.mxu0 %v1339
  %1940 = vmatprep.subr.bf16.mxu0 0
  %1941 = vmatpush1.bf16.msra.mxu0 %v1340
  %1942 = vmatprep.subr.bf16.mxu0 0
  %1943 = vmatpush1.bf16.msra.mxu0 %v1341
  %1944 = vmatprep.subr.bf16.mxu0 0
  %1945 = vmatpush1.bf16.msra.mxu0 %v1342
  %1946 = vmatprep.subr.bf16.mxu0 0
  %1947 = vmatpush1.bf16.msra.mxu0 %v1343
  %1948 = vmatprep.subr.bf16.mxu0 0
  %1949 = vmatpush1.bf16.msra.mxu0 %v1344
  %1950 = vmatprep.subr.bf16.mxu0 0
  %1951 = vmatpush1.bf16.msra.mxu0 %v1345
  %1952 = vmatprep.subr.bf16.mxu0 0
  %1953 = vmatpush1.bf16.msra.mxu0 %v1346
  %1954 = vmatprep.subr.bf16.mxu0 0
  %1955 = vmatpush1.bf16.msra.mxu0 %v1347
  %1956 = vmatprep.mubr.bf16.mxu0 %v445
  %1957 = vmatmul.mubr.bf16.gmra.mrb[0].mxu0 %v444
  %v1958 = vpop.f32.mrb[0].mxu0
  %v1959 = vadd.f32 %v1919, %v1958
  %v1960 = vpop.f32.mrb[0].mxu0
  %v1961 = vpop.f32.mrb[0].mxu0
  %v1962 = vpop.f32.mrb[0].mxu0
  %1963 = vdwg.mxu0
  %v1964 = vmax.f32 %v1959, 0.0
  %v1965 = vpack.c.bf16 %v1964, %v1964
  %v1966 = vld [vmem:[%s3] sm:$0xf]
  %v1967 = vld [vmem:[%s3 + $0x4] sm:$0xf]
  %v1968 = vld [vmem:[%s3 + $0x8] sm:$0xf]
  %v1969 = vld [vmem:[%s3 + $0xc] sm:$0xf]
  %v1970 = vld [vmem:[%s3 + $0x10] sm:$0xf]
  %v1971 = vld [vmem:[%s3 + $0x14] sm:$0xf]
  %v1972 = vld [vmem:[%s3 + $0x18] sm:$0xf]
  %v1973 = vld [vmem:[%s3 + $0x1c] sm:$0xf]
  %v1974 = vld [vmem:[%s3 + $0x20] sm:$0xf]
  %v1975 = vld [vmem:[%s3 + $0x24] sm:$0xf]
  %v1976 = vld [vmem:[%s3 + $0x28] sm:$0xf]
  %v1977 = vld [vmem:[%s3 + $0x2c] sm:$0xf]
  %v1978 = vld [vmem:[%s3 + $0x30] sm:$0xf]
  %v1979 = vld [vmem:[%s3 + $0x34] sm:$0xf]
  %v1980 = vld [vmem:[%s3 + $0x38] sm:$0xf]
  %v1981 = vld [vmem:[%s3 + $0x3c] sm:$0xf]
  %v1982 = vld [vmem:[%s4] sm:$0x1]
  %v1984 = vlaneseq
  %v1985 = vshrl.u32 %v1984, 7
  %v1986 = vsub.s32 0, %v1985
  %v1987 = vrot.slane %v1982, %v1986
  %v2005 = vunpack.c.l.b16 %v1966
  %v2006 = vunpack.c.l.b16 %v1967
  %v2007 = vunpack.c.l.b16 %v1968
  %v2008 = vunpack.c.l.b16 %v1969
  %v2009 = vunpack.c.l.b16 %v1970
  %v2010 = vunpack.c.l.b16 %v1971
  %v2011 = vunpack.c.l.b16 %v1972
  %v2012 = vunpack.c.l.b16 %v1973
  %v2013 = vunpack.c.l.b16 %v1974
  %v2014 = vunpack.c.l.b16 %v1975
  %v2015 = vunpack.c.l.b16 %v1976
  %v2016 = vunpack.c.l.b16 %v1977
  %v2017 = vunpack.c.l.b16 %v1978
  %v2018 = vunpack.c.l.b16 %v1979
  %v2019 = vunpack.c.l.b16 %v1980
  %v2020 = vunpack.c.l.b16 %v1981
  %v2021 = vpack.c.b16 %v2006, %v2005
  %v2022 = vpack.c.b16 %v2008, %v2007
  %v2023 = vpack.c.b16 %v2010, %v2009
  %v2024 = vpack.c.b16 %v2012, %v2011
  %v2025 = vpack.c.b16 %v2014, %v2013
  %v2026 = vpack.c.b16 %v2016, %v2015
  %v2027 = vpack.c.b16 %v2018, %v2017
  %v2028 = vpack.c.b16 %v2020, %v2019
  %2037 = vmatprep.subr.bf16.mxu0 0
  %2038 = vmatpush1.bf16.msra.mxu0 %v2021
  %2039 = vmatprep.subr.bf16.mxu0 0
  %2040 = vmatpush1.bf16.msra.mxu0 %v2022
  %2041 = vmatprep.subr.bf16.mxu0 0
  %2042 = vmatpush1.bf16.msra.mxu0 %v2023
  %2043 = vmatprep.subr.bf16.mxu0 0
  %2044 = vmatpush1.bf16.msra.mxu0 %v2024
  %2045 = vmatprep.subr.bf16.mxu0 0
  %2046 = vmatpush1.bf16.msra.mxu0 %v2025
  %2047 = vmatprep.subr.bf16.mxu0 0
  %2048 = vmatpush1.bf16.msra.mxu0 %v2026
  %2049 = vmatprep.subr.bf16.mxu0 0
  %2050 = vmatpush1.bf16.msra.mxu0 %v2027
  %2051 = vmatprep.subr.bf16.mxu0 0
  %2052 = vmatpush1.bf16.msra.mxu0 %v2028
  %2053 = vmatprep.subr.bf16.mxu0 0
  %2054 = vmatpush1.bf16.msra.mxu0 0
  %2055 = vmatprep.subr.bf16.mxu0 0
  %2056 = vmatpush1.bf16.msra.mxu0 0
  %2057 = vmatprep.subr.bf16.mxu0 0
  %2058 = vmatpush1.bf16.msra.mxu0 0
  %2059 = vmatprep.subr.bf16.mxu0 0
  %2060 = vmatpush1.bf16.msra.mxu0 0
  %2061 = vmatprep.subr.bf16.mxu0 0
  %2062 = vmatpush1.bf16.msra.mxu0 0
  %2063 = vmatprep.subr.bf16.mxu0 0
  %2064 = vmatpush1.bf16.msra.mxu0 0
  %2065 = vmatprep.subr.bf16.mxu0 0
  %2066 = vmatpush1.bf16.msra.mxu0 0
  %2067 = vmatprep.subr.bf16.mxu0 0
  %2068 = vmatpush1.bf16.msra.mxu0 0
  %2069 = vmatprep.mubr.bf16.mxu0 0
  %2070 = vmatmul.mubr.bf16.gmra.mrb[0].mxu0 %v1965
  %v2071 = vpop.f32.mrb[0].mxu0
  %v2072 = vadd.f32 %v1987, %v2071
  %v2073 = vpop.f32.mrb[0].mxu0
  %v2074 = vpop.f32.mrb[0].mxu0
  %v2075 = vpop.f32.mrb[0].mxu0
  %2076 = vdwg.mxu0
  %2077 = vst [vmem:[%s5] sm:$0xff] %v2072
  // Predicated region
  $region22: #{nn_forward.1} parent=0 // pred_check
    _
  $region23: #{nn_forward.1} parent=0 // pred_check_branch
    %2079 = sbr.rel (0) target = $region25
  $region24: #{nn_forward.1} parent=0 // pred_region
    _
  $region25: #{nn_forward.1} parent=0 // pred_fallthru
    _
  // Predicated region
  $region26: #{nn_forward.1} parent=0 // pred_check
    _
  $region27: #{nn_forward.1} parent=0 // pred_check_branch
    %2081 = sbr.rel (0) target = $region29
  $region28: #{nn_forward.1} parent=0 // pred_region
    _
  $region29: #{nn_forward.1} parent=0 // pred_fallthru
    _

</llo_original>
